<compile_context>
chip_gen: v6e
topology: v6e:2x2x1
jax: 0.10.0
libtpu: 0.0.40
codegen_flags: <defaults>
</compile_context>

<pallas_src>
import functools

import jax
import jax.numpy as jnp
import numpy as np
from jax.experimental import pallas as pl
from jax.experimental.pallas import tpu as pltpu

EPS = 1e-8
LANE = 128
SUBLANE = 8


def _round_up(x, m):
    return ((x + m - 1) // m) * m


def _cdiv(a, b):
    return -(-a // b)


def ei_shunt_kernel(ne_p, approx_recip,
                    x_ref, w1_ref, weiT_ref, ea_ref, g_ref, b_ref,
                    o_ref, acc_ref):
    """Grid = (batch_tiles, k_tiles); k ('arbitrary') is the last axis.

    x_ref   : (bm, tk)           activation tile (compute dtype)
    w1_ref  : (tk, ne_p + ni_p)  [ Wex.T | Wix.T ] K-tile (zero padded)
    weiT_ref: (ni_p, ne_p)       Wei.T (zero padded)
    ea_ref  : (1, ni_p)          exp(alpha) row, f32
    g_ref   : (1, ne_p)          gain row, f32 (padded lanes = 0)
    b_ref   : (1, ne_p)          bias row, f32 (padded lanes = 0)
    o_ref   : (bm, ne_p)         output (lane-dense)
    acc_ref : (bm, ne_p + ni_p)  f32 scratch accumulator for [ ze | zi ]
    """
    k = pl.program_id(1)

    @pl.when(k == 0)
    def _():
        acc_ref[...] = jnp.zeros_like(acc_ref)

    # Fused excitatory + inhibitory drive, accumulated over K tiles:
    # one MXU push per K tile -> [ ze | zi ] in f32.
    acc_ref[...] += jnp.dot(x_ref[...], w1_ref[...],
                            preferred_element_type=jnp.float32)

    @pl.when(k == pl.num_programs(1) - 1)
    def _():
        ze_zi = acc_ref[...]
        ze = ze_zi[:, :ne_p]                       # (bm, ne_p) lane-aligned
        zi = ze_zi[:, ne_p:]                       # (bm, ni_p) lane-aligned

        w_dt = weiT_ref.dtype
        weiT = weiT_ref[...]

        # Subtractive inhibition:  inh = zi @ Wei.T
        inh = jnp.dot(zi.astype(w_dt), weiT,
                      preferred_element_type=jnp.float32)

        # Divisive inhibition: gamma = (zi * exp(alpha)) @ Wei.T + eps.
        # exp(alpha) is applied on the LHS in f32 (VPU) so it is never baked
        # into a bf16 weight; padded gamma lanes are exactly eps.
        zi_scaled = zi * ea_ref[...]
        gamma = jnp.dot(zi_scaled.astype(w_dt), weiT,
                        preferred_element_type=jnp.float32) + EPS

        z_hat = ze - inh
        # approx=True routes 1/gamma to the otherwise-idle EUP slot.
        inv_gamma = pl.reciprocal(gamma, approx=approx_recip)
        z = g_ref[...] * (z_hat * inv_gamma) + b_ref[...]
        # nonlinearity is None in this configuration -> identity
        o_ref[...] = z.astype(o_ref.dtype)


def ei_dense_with_shunt(x, Wex, Wix, Wei, alpha, g, b, *,
                        bm=512,
                        compute_dtype=jnp.bfloat16,
                        out_dtype=None,
                        approx_reciprocal=True,
                        max_w1_tile_bytes=16 * 1024 * 1024):
    """x: (B, n_input). Returns (B, ne), matching the torch module's forward."""
    B, n_input = x.shape
    ne, ni = Wei.shape
    assert Wex.shape == (ne, n_input)
    assert Wix.shape == (ni, n_input)

    f32 = jnp.float32
    out_dtype = x.dtype if out_dtype is None else out_dtype
    itemsize = jnp.dtype(compute_dtype).itemsize
    out_itemsize = jnp.dtype(out_dtype).itemsize

    # ---- lane-dense padded dims -------------------------------------------
    ne_p = _round_up(ne, LANE)
    ni_p = _round_up(ni, LANE)
    k_p = _round_up(n_input, LANE)

    # ---- K tiling: keep each W1 buffer under max_w1_tile_bytes -------------
    w1_bytes = k_p * (ne_p + ni_p) * itemsize
    budget = max(1, int(max_w1_tile_bytes))
    if w1_bytes <= budget:
        tk = k_p
    else:
        tk = _round_up(_cdiv(k_p, _cdiv(w1_bytes, budget)), LANE)
    k_pp = _round_up(k_p, tk)
    n_k = k_pp // tk

    # ---- batch tiling: minimize padding, keep >=2 steps for v7x megacore ---
    B8 = _round_up(B, SUBLANE)
    n_b = _cdiv(B8, bm)
    if B8 >= 2 * SUBLANE:
        n_b = max(n_b, 2)
    bm_eff = _round_up(_cdiv(B8, n_b), SUBLANE)
    n_b = _cdiv(B8, bm_eff)
    B_p = n_b * bm_eff

    # ---- VMEM budget, capped per generation ---------------------------------
    try:
        info = pltpu.get_tpu_info()
        vmem_phys = int(getattr(info, "vmem_capacity_bytes", 64 * 1024 * 1024))
    except Exception:
        vmem_phys = 64 * 1024 * 1024        # v7x (smallest across generations)
    vmem_ceiling = (vmem_phys * 7) // 8     # headroom for compiler scratch

    def vmem_need(bm_rows):
        w1_buf = (1 if n_k == 1 else 2) * tk * (ne_p + ni_p) * itemsize
        wei_buf = ni_p * ne_p * itemsize
        x_buf = 2 * bm_rows * tk * itemsize
        o_buf = 2 * bm_rows * ne_p * out_itemsize
        acc = bm_rows * (ne_p + ni_p) * 4
        vecs = 2 * (2 * ne_p + ni_p) * 4
        interm = bm_rows * (3 * ne_p + ni_p) * 4   # ze/inh/gamma/zi live f32 values
        return w1_buf + wei_buf + x_buf + o_buf + acc + vecs + interm

    while vmem_need(bm_eff) > vmem_ceiling and bm_eff > SUBLANE:
        bm_eff = max(SUBLANE, _round_up(bm_eff // 2, SUBLANE))
        n_b = _cdiv(B8, bm_eff)
        B_p = n_b * bm_eff

    vmem_limit = int(min(vmem_ceiling, max(vmem_need(bm_eff), 32 * 1024 * 1024)))

    # ---- one-time wrapper-side weight fusion (outside the hot loop) --------
    # W1 = [ Wex.T | Wix.T ]  ->  x @ W1 = [ ze | zi ]
    W1 = jnp.zeros((k_pp, ne_p + ni_p), compute_dtype)
    W1 = W1.at[:n_input, :ne].set(Wex.T.astype(compute_dtype))
    W1 = W1.at[:n_input, ne_p:ne_p + ni].set(Wix.T.astype(compute_dtype))

    # Wei.T only (gamma uses the same weight with an f32 LHS scale in-kernel).
    WeiT = jnp.zeros((ni_p, ne_p), compute_dtype)
    WeiT = WeiT.at[:ni, :ne].set(Wei.T.astype(compute_dtype))

    ea_row = jnp.zeros((1, ni_p), f32).at[0, :ni].set(
        jnp.exp(alpha.astype(f32)).reshape(-1))
    # g / b padded lanes MUST be 0 so padded output lanes stay exactly 0.
    g_row = jnp.zeros((1, ne_p), f32).at[0, :ne].set(g.reshape(-1).astype(f32))
    b_row = jnp.zeros((1, ne_p), f32).at[0, :ne].set(b.reshape(-1).astype(f32))

    # ---- activations: skip the padding pass when already aligned -----------
    if (B_p, k_pp) == (B, n_input) and x.dtype == compute_dtype:
        x_p = x
    else:
        x_p = jnp.zeros((B_p, k_pp), compute_dtype).at[:B, :n_input].set(
            x.astype(compute_dtype))

    grid = (n_b, n_k)
    kernel = functools.partial(ei_shunt_kernel, ne_p, bool(approx_reciprocal))

    def call(single_buffer_consts):
        def const_spec(shape):
            if single_buffer_consts:
                return pl.BlockSpec(shape, lambda i, k: (0, 0),
                                    pipeline_mode=pl.Buffered(1))
            return pl.BlockSpec(shape, lambda i, k: (0, 0))

        if n_k == 1:
            w1_spec = const_spec((tk, ne_p + ni_p))          # fully resident
        else:
            w1_spec = pl.BlockSpec((tk, ne_p + ni_p), lambda i, k: (k, 0))

        return pl.pallas_call(
            kernel,
            out_shape=jax.ShapeDtypeStruct((B_p, ne_p), out_dtype),
            grid_spec=pltpu.PrefetchScalarGridSpec(
                num_scalar_prefetch=0,
                grid=grid,
                in_specs=[
                    pl.BlockSpec((bm_eff, tk), lambda i, k: (i, k)),  # x tile
                    w1_spec,                                          # [Wex.T|Wix.T]
                    const_spec((ni_p, ne_p)),                         # Wei.T
                    const_spec((1, ni_p)),                            # exp(alpha)
                    const_spec((1, ne_p)),                            # g
                    const_spec((1, ne_p)),                            # b
                ],
                out_specs=pl.BlockSpec((bm_eff, ne_p), lambda i, k: (i, 0)),
                scratch_shapes=[pltpu.VMEM((bm_eff, ne_p + ni_p), jnp.float32)],
            ),
            compiler_params=pltpu.CompilerParams(
                dimension_semantics=("parallel", "arbitrary"),
                vmem_limit_bytes=vmem_limit,
            ),
        )(x_p, W1, WeiT, ea_row, g_row, b_row)

    try:
        out_p = call(single_buffer_consts=True)
    except Exception:
        # Some Mosaic versions reject Buffered(1); fall back to default
        # double-buffered constant blocks (extra VMEM only, same results).
        out_p = call(single_buffer_consts=False)

    if (B_p, ne_p) == (B, ne):
        return out_p
    return out_p[:B, :ne]


def reference_forward(x, Wex, Wix, Wei, alpha, g, b):
    """Direct transcription of the PyTorch forward (column-major), for checking."""
    xT = x.T
    ze = Wex @ xT
    zi = Wix @ xT
    z_hat = ze - Wei @ zi
    gamma = (jnp.exp(alpha) * Wei) @ zi + EPS
    z = g * (z_hat / gamma) + b
    return z.T


if __name__ == "__main__":
    key = jax.random.PRNGKey(0)

    def make_case(k, B, n_input, ne, ni, rand_gb=False):
        kx, kwex, kwix, kwei, kb, kg = jax.random.split(k, 6)
        # Non-negative x / Wix / Wei keep gamma bounded away from zero, as the
        # E/I model assumes (eps alone does not protect the division).
        x = jnp.abs(jax.random.normal(kx, (B, n_input), dtype=jnp.float32))
        Wex = jax.random.normal(kwex, (ne, n_input), dtype=jnp.float32) * 0.1
        Wix = jnp.abs(jax.random.normal(kwix, (ni, n_input), dtype=jnp.float32)) * 0.1
        Wei = jnp.abs(jax.random.normal(kwei, (ne, ni), dtype=jnp.float32)) * 0.1
        alpha = jnp.ones((1, ni), jnp.float32)          # torch.ones(1, ni)
        if rand_gb:
            b = jax.random.normal(kb, (ne, 1), dtype=jnp.float32) * 0.1
            g = 1.0 + 0.1 * jnp.abs(jax.random.normal(kg, (ne, 1), dtype=jnp.float32))
        else:
            b = jnp.zeros((ne, 1), jnp.float32)         # torch.zeros(ne, 1)
            g = jnp.ones((ne, 1), jnp.float32)          # torch.ones(ne, 1)
        return x, Wex, Wix, Wei, alpha, g, b

    k1, k2 = jax.random.split(key)

    # Case 1: module-scale shapes (B=16, n_input=32, ne=16, ni=8).
    args1 = make_case(k1, B=16, n_input=32, ne=16, ni=8)
    ref1 = reference_forward(*args1)

    # 1a: exact-parity path (f32 compute, exact reciprocal).
    out_f32 = jax.block_until_ready(
        ei_dense_with_shunt(*args1, compute_dtype=jnp.float32,
                            approx_reciprocal=False))
    np.testing.assert_allclose(np.asarray(out_f32), np.asarray(ref1),
                               rtol=5e-4, atol=1e-3)

    # 1b: fast default path (bf16 weights/activations, f32 accumulation,
    #     EUP reciprocal) — looser tolerance for the bf16 quantization.
    out_bf16 = jax.block_until_ready(ei_dense_with_shunt(*args1))
    np.testing.assert_allclose(np.asarray(out_bf16), np.asarray(ref1),
                               rtol=5e-2, atol=5e-2)

    # Case 2: forces the multi-step K-tiled accumulator path plus batch/K padding.
    args2 = make_case(k2, B=24, n_input=300, ne=20, ni=12, rand_gb=True)
    ref2 = reference_forward(*args2)
    out_kt = jax.block_until_ready(
        ei_dense_with_shunt(*args2, compute_dtype=jnp.float32,
                            approx_reciprocal=False,
                            max_w1_tile_bytes=128 * 1024))
    np.testing.assert_allclose(np.asarray(out_kt), np.asarray(ref2),
                               rtol=5e-4, atol=1e-3)

    print("KERNEL_OK")
</pallas_src>

<mosaic_0001>
module attributes {stable_mosaic.version = 11 : i64} {
  func.func @ei_shunt_kernel(%arg0: i32, %arg1: i32, %arg2: memref<8x128xf32, #tpu.memory_space<vmem>>, %arg3: memref<128x256xf32, #tpu.memory_space<vmem>>, %arg4: memref<128x128xf32, #tpu.memory_space<vmem>>, %arg5: memref<1x128xf32, #tpu.memory_space<vmem>>, %arg6: memref<1x128xf32, #tpu.memory_space<vmem>>, %arg7: memref<1x128xf32, #tpu.memory_space<vmem>>, %arg8: memref<8x128xf32, #tpu.memory_space<vmem>>, %arg9: memref<8x256xf32, #tpu.memory_space<vmem>>) attributes {dimension_semantics = [#tpu.dimension_semantics<parallel>, #tpu.dimension_semantics<arbitrary>], iteration_bounds = array<i64: 2, 1>, scalar_prefetch = 0 : i64, scratch_operands = 1 : i64, tpu.core_type = #tpu.core_type<tc>, window_params = [{transform_indices = @transform_0, window_bounds = array<i64: 8, 128>}, {pipeline_mode = #tpu.pipeline_mode<synchronous>, transform_indices = @transform_1, window_bounds = array<i64: 128, 256>}, {pipeline_mode = #tpu.pipeline_mode<synchronous>, transform_indices = @transform_2, window_bounds = array<i64: 128, 128>}, {pipeline_mode = #tpu.pipeline_mode<synchronous>, transform_indices = @transform_3, window_bounds = array<i64: 1, 128>}, {pipeline_mode = #tpu.pipeline_mode<synchronous>, transform_indices = @transform_4, window_bounds = array<i64: 1, 128>}, {pipeline_mode = #tpu.pipeline_mode<synchronous>, transform_indices = @transform_5, window_bounds = array<i64: 1, 128>}, {transform_indices = @transform_6, window_bounds = array<i64: 8, 128>}]} {
    %c0_i32 = arith.constant 0 : i32
    %0 = arith.cmpi eq, %arg1, %c0_i32 : i32
    %1 = arith.extui %0 : i1 to i32
    %c0_i32_0 = arith.constant 0 : i32
    %2 = arith.cmpi ne, %1, %c0_i32_0 : i32
    scf.if %2 {
      %cst_10 = arith.constant 0.000000e+00 : f32
      %12 = vector.broadcast %cst_10 : f32 to vector<8x256xf32>
      %c0_11 = arith.constant 0 : index
      %c0_12 = arith.constant 0 : index
      %13 = vector.load %arg9[%c0_11, %c0_12] : memref<8x256xf32, #tpu.memory_space<vmem>>, vector<8x256xf32>
      tpu.vector_store %arg9[%c0_11, %c0_12], %12 {strides = array<i32>} : memref<8x256xf32, #tpu.memory_space<vmem>>, vector<8x256xf32>,
    } else {
    }
    %c0 = arith.constant 0 : index
    %c0_1 = arith.constant 0 : index
    %3 = vector.load %arg9[%c0, %c0_1] : memref<8x256xf32, #tpu.memory_space<vmem>>, vector<8x256xf32>
    %c0_2 = arith.constant 0 : index
    %c0_3 = arith.constant 0 : index
    %4 = vector.load %arg2[%c0_2, %c0_3] : memref<8x128xf32, #tpu.memory_space<vmem>>, vector<8x128xf32>
    %c0_4 = arith.constant 0 : index
    %c0_5 = arith.constant 0 : index
    %5 = vector.load %arg3[%c0_4, %c0_5] : memref<128x256xf32, #tpu.memory_space<vmem>>, vector<128x256xf32>
    %cst = arith.constant dense<0.000000e+00> : vector<8x256xf32>
    %6 = tpu.matmul %4, %5, %cst {dimension_numbers = #tpu.dot_dimension_numbers<[1], [0], [0], [1], [0, 0, 1, 1], [], []>} : vector<8x128xf32>, vector<128x256xf32>, vector<8x256xf32> -> vector<8x256xf32>
    %7 = arith.addf %3, %6 : vector<8x256xf32>
    %c0_6 = arith.constant 0 : index
    %c0_7 = arith.constant 0 : index
    %8 = vector.load %arg9[%c0_6, %c0_7] : memref<8x256xf32, #tpu.memory_space<vmem>>, vector<8x256xf32>
    tpu.vector_store %arg9[%c0_6, %c0_7], %7 {strides = array<i32>} : memref<8x256xf32, #tpu.memory_space<vmem>>, vector<8x256xf32>,
    %c0_i32_8 = arith.constant 0 : i32
    %9 = arith.cmpi eq, %arg1, %c0_i32_8 : i32
    %10 = arith.extui %9 : i1 to i32
    %c0_i32_9 = arith.constant 0 : i32
    %11 = arith.cmpi ne, %10, %c0_i32_9 : i32
    scf.if %11 {
      %c0_10 = arith.constant 0 : index
      %c0_11 = arith.constant 0 : index
      %12 = vector.load %arg9[%c0_10, %c0_11] : memref<8x256xf32, #tpu.memory_space<vmem>>, vector<8x256xf32>
      %13 = vector.extract_strided_slice %12 {offsets = [0, 0], sizes = [8, 128], strides = [1, 1]} : vector<8x256xf32> to vector<8x128xf32>
      %14 = vector.extract_strided_slice %12 {offsets = [0, 128], sizes = [8, 128], strides = [1, 1]} : vector<8x256xf32> to vector<8x128xf32>
      %c0_12 = arith.constant 0 : index
      %c0_13 = arith.constant 0 : index
      %15 = vector.load %arg4[%c0_12, %c0_13] : memref<128x128xf32, #tpu.memory_space<vmem>>, vector<128x128xf32>
      %cst_14 = arith.constant dense<0.000000e+00> : vector<8x128xf32>
      %16 = tpu.matmul %14, %15, %cst_14 {dimension_numbers = #tpu.dot_dimension_numbers<[1], [0], [0], [1], [0, 0, 1, 1], [], []>} : vector<8x128xf32>, vector<128x128xf32>, vector<8x128xf32> -> vector<8x128xf32>
      %c0_15 = arith.constant 0 : index
      %c0_16 = arith.constant 0 : index
      %17 = vector.load %arg5[%c0_15, %c0_16] : memref<1x128xf32, #tpu.memory_space<vmem>>, vector<1x128xf32>
      %18 = vector.broadcast %17 : vector<1x128xf32> to vector<8x128xf32>
      %19 = arith.mulf %14, %18 : vector<8x128xf32>
      %cst_17 = arith.constant dense<0.000000e+00> : vector<8x128xf32>
      %20 = tpu.matmul %19, %15, %cst_17 {dimension_numbers = #tpu.dot_dimension_numbers<[1], [0], [0], [1], [0, 0, 1, 1], [], []>} : vector<8x128xf32>, vector<128x128xf32>, vector<8x128xf32> -> vector<8x128xf32>
      %cst_18 = arith.constant 9.99999993E-9 : f32
      %21 = vector.broadcast %cst_18 : f32 to vector<8x128xf32>
      %22 = arith.addf %20, %21 : vector<8x128xf32>
      %23 = arith.subf %13, %16 : vector<8x128xf32>
      %24 = tpu.reciprocal %22 : vector<8x128xf32> -> vector<8x128xf32>
      %c0_19 = arith.constant 0 : index
      %c0_20 = arith.constant 0 : index
      %25 = vector.load %arg6[%c0_19, %c0_20] : memref<1x128xf32, #tpu.memory_space<vmem>>, vector<1x128xf32>
      %26 = arith.mulf %23, %24 : vector<8x128xf32>
      %27 = vector.broadcast %25 : vector<1x128xf32> to vector<8x128xf32>
      %28 = arith.mulf %27, %26 : vector<8x128xf32>
      %c0_21 = arith.constant 0 : index
      %c0_22 = arith.constant 0 : index
      %29 = vector.load %arg7[%c0_21, %c0_22] : memref<1x128xf32, #tpu.memory_space<vmem>>, vector<1x128xf32>
      %30 = vector.broadcast %29 : vector<1x128xf32> to vector<8x128xf32>
      %31 = arith.addf %28, %30 : vector<8x128xf32>
      %c0_23 = arith.constant 0 : index
      %c0_24 = arith.constant 0 : index
      %32 = vector.load %arg8[%c0_23, %c0_24] : memref<8x128xf32, #tpu.memory_space<vmem>>, vector<8x128xf32>
      tpu.vector_store %arg8[%c0_23, %c0_24], %31 {strides = array<i32>} : memref<8x128xf32, #tpu.memory_space<vmem>>, vector<8x128xf32>,
    } else {
    }
    return
  }
  func.func @transform_0(%arg0: i32, %arg1: i32) -> (i32, i32) {
    %c0_i32 = arith.constant 0 : i32
    return %arg0, %arg1 : i32, i32
  }
  func.func @transform_1(%arg0: i32, %arg1: i32) -> (i32, i32) {
    %c0_i32 = arith.constant 0 : i32
    %c0_i32_0 = arith.constant 0 : i32
    %c0_i32_1 = arith.constant 0 : i32
    return %c0_i32, %c0_i32_0 : i32, i32
  }
  func.func @transform_2(%arg0: i32, %arg1: i32) -> (i32, i32) {
    %c0_i32 = arith.constant 0 : i32
    %c0_i32_0 = arith.constant 0 : i32
    %c0_i32_1 = arith.constant 0 : i32
    return %c0_i32, %c0_i32_0 : i32, i32
  }
  func.func @transform_3(%arg0: i32, %arg1: i32) -> (i32, i32) {
    %c0_i32 = arith.constant 0 : i32
    %c0_i32_0 = arith.constant 0 : i32
    %c0_i32_1 = arith.constant 0 : i32
    return %c0_i32, %c0_i32_0 : i32, i32
  }
  func.func @transform_4(%arg0: i32, %arg1: i32) -> (i32, i32) {
    %c0_i32 = arith.constant 0 : i32
    %c0_i32_0 = arith.constant 0 : i32
    %c0_i32_1 = arith.constant 0 : i32
    return %c0_i32, %c0_i32_0 : i32, i32
  }
  func.func @transform_5(%arg0: i32, %arg1: i32) -> (i32, i32) {
    %c0_i32 = arith.constant 0 : i32
    %c0_i32_0 = arith.constant 0 : i32
    %c0_i32_1 = arith.constant 0 : i32
    return %c0_i32, %c0_i32_0 : i32, i32
  }
  func.func @transform_6(%arg0: i32, %arg1: i32) -> (i32, i32) {
    %c0_i32 = arith.constant 0 : i32
    %c0_i32_0 = arith.constant 0 : i32
    return %arg0, %c0_i32 : i32, i32
  }
}

module attributes {stable_mosaic.version = 11 : i64} {
  func.func @ei_shunt_kernel(%arg0: i32, %arg1: i32, %arg2: memref<8x128xf32, #tpu.memory_space<vmem>>, %arg3: memref<128x256xf32, #tpu.memory_space<vmem>>, %arg4: memref<128x128xf32, #tpu.memory_space<vmem>>, %arg5: memref<1x128xf32, #tpu.memory_space<vmem>>, %arg6: memref<1x128xf32, #tpu.memory_space<vmem>>, %arg7: memref<1x128xf32, #tpu.memory_space<vmem>>, %arg8: memref<8x128xf32, #tpu.memory_space<vmem>>, %arg9: memref<8x256xf32, #tpu.memory_space<vmem>>) attributes {dimension_semantics = [#tpu.dimension_semantics<parallel>, #tpu.dimension_semantics<arbitrary>], iteration_bounds = array<i64: 2, 1>, scalar_prefetch = 0 : i64, scratch_operands = 1 : i64, tpu.core_type = #tpu.core_type<tc>, window_params = [{transform_indices = @transform_0, window_bounds = array<i64: 8, 128>}, {pipeline_mode = #tpu.pipeline_mode<synchronous>, transform_indices = @transform_1, window_bounds = array<i64: 128, 256>}, {pipeline_mode = #tpu.pipeline_mode<synchronous>, transform_indices = @transform_2, window_bounds = array<i64: 128, 128>}, {pipeline_mode = #tpu.pipeline_mode<synchronous>, transform_indices = @transform_3, window_bounds = array<i64: 1, 128>}, {pipeline_mode = #tpu.pipeline_mode<synchronous>, transform_indices = @transform_4, window_bounds = array<i64: 1, 128>}, {pipeline_mode = #tpu.pipeline_mode<synchronous>, transform_indices = @transform_5, window_bounds = array<i64: 1, 128>}, {transform_indices = @transform_6, window_bounds = array<i64: 8, 128>}]} {
    %c0_i32 = arith.constant 0 : i32
    %0 = arith.cmpi eq, %arg1, %c0_i32 : i32
    %1 = arith.extui %0 : i1 to i32
    %c0_i32_0 = arith.constant 0 : i32
    %2 = arith.cmpi ne, %1, %c0_i32_0 : i32
    scf.if %2 {
      %cst_10 = arith.constant 0.000000e+00 : f32
      %12 = vector.broadcast %cst_10 : f32 to vector<8x256xf32>
      %c0_11 = arith.constant 0 : index
      %c0_12 = arith.constant 0 : index
      %13 = vector.load %arg9[%c0_11, %c0_12] : memref<8x256xf32, #tpu.memory_space<vmem>>, vector<8x256xf32>
      tpu.vector_store %arg9[%c0_11, %c0_12], %12 {strides = array<i32>} : memref<8x256xf32, #tpu.memory_space<vmem>>, vector<8x256xf32>,
    } else {
    }
    %c0 = arith.constant 0 : index
    %c0_1 = arith.constant 0 : index
    %3 = vector.load %arg9[%c0, %c0_1] : memref<8x256xf32, #tpu.memory_space<vmem>>, vector<8x256xf32>
    %c0_2 = arith.constant 0 : index
    %c0_3 = arith.constant 0 : index
    %4 = vector.load %arg2[%c0_2, %c0_3] : memref<8x128xf32, #tpu.memory_space<vmem>>, vector<8x128xf32>
    %c0_4 = arith.constant 0 : index
    %c0_5 = arith.constant 0 : index
    %5 = vector.load %arg3[%c0_4, %c0_5] : memref<128x256xf32, #tpu.memory_space<vmem>>, vector<128x256xf32>
    %cst = arith.constant dense<0.000000e+00> : vector<8x256xf32>
    %6 = tpu.matmul %4, %5, %cst {dimension_numbers = #tpu.dot_dimension_numbers<[1], [0], [0], [1], [0, 0, 1, 1], [], []>} : vector<8x128xf32>, vector<128x256xf32>, vector<8x256xf32> -> vector<8x256xf32>
    %7 = arith.addf %3, %6 : vector<8x256xf32>
    %c0_6 = arith.constant 0 : index
    %c0_7 = arith.constant 0 : index
    %8 = vector.load %arg9[%c0_6, %c0_7] : memref<8x256xf32, #tpu.memory_space<vmem>>, vector<8x256xf32>
    tpu.vector_store %arg9[%c0_6, %c0_7], %7 {strides = array<i32>} : memref<8x256xf32, #tpu.memory_space<vmem>>, vector<8x256xf32>,
    %c0_i32_8 = arith.constant 0 : i32
    %9 = arith.cmpi eq, %arg1, %c0_i32_8 : i32
    %10 = arith.extui %9 : i1 to i32
    %c0_i32_9 = arith.constant 0 : i32
    %11 = arith.cmpi ne, %10, %c0_i32_9 : i32
    scf.if %11 {
      %c0_10 = arith.constant 0 : index
      %c0_11 = arith.constant 0 : index
      %12 = vector.load %arg9[%c0_10, %c0_11] : memref<8x256xf32, #tpu.memory_space<vmem>>, vector<8x256xf32>
      %13 = vector.extract_strided_slice %12 {offsets = [0, 0], sizes = [8, 128], strides = [1, 1]} : vector<8x256xf32> to vector<8x128xf32>
      %14 = vector.extract_strided_slice %12 {offsets = [0, 128], sizes = [8, 128], strides = [1, 1]} : vector<8x256xf32> to vector<8x128xf32>
      %c0_12 = arith.constant 0 : index
      %c0_13 = arith.constant 0 : index
      %15 = vector.load %arg4[%c0_12, %c0_13] : memref<128x128xf32, #tpu.memory_space<vmem>>, vector<128x128xf32>
      %cst_14 = arith.constant dense<0.000000e+00> : vector<8x128xf32>
      %16 = tpu.matmul %14, %15, %cst_14 {dimension_numbers = #tpu.dot_dimension_numbers<[1], [0], [0], [1], [0, 0, 1, 1], [], []>} : vector<8x128xf32>, vector<128x128xf32>, vector<8x128xf32> -> vector<8x128xf32>
      %c0_15 = arith.constant 0 : index
      %c0_16 = arith.constant 0 : index
      %17 = vector.load %arg5[%c0_15, %c0_16] : memref<1x128xf32, #tpu.memory_space<vmem>>, vector<1x128xf32>
      %18 = vector.broadcast %17 : vector<1x128xf32> to vector<8x128xf32>
      %19 = arith.mulf %14, %18 : vector<8x128xf32>
      %cst_17 = arith.constant dense<0.000000e+00> : vector<8x128xf32>
      %20 = tpu.matmul %19, %15, %cst_17 {dimension_numbers = #tpu.dot_dimension_numbers<[1], [0], [0], [1], [0, 0, 1, 1], [], []>} : vector<8x128xf32>, vector<128x128xf32>, vector<8x128xf32> -> vector<8x128xf32>
      %cst_18 = arith.constant 9.99999993E-9 : f32
      %21 = vector.broadcast %cst_18 : f32 to vector<8x128xf32>
      %22 = arith.addf %20, %21 : vector<8x128xf32>
      %23 = arith.subf %13, %16 : vector<8x128xf32>
      %24 = tpu.reciprocal %22 : vector<8x128xf32> -> vector<8x128xf32>
      %c0_19 = arith.constant 0 : index
      %c0_20 = arith.constant 0 : index
      %25 = vector.load %arg6[%c0_19, %c0_20] : memref<1x128xf32, #tpu.memory_space<vmem>>, vector<1x128xf32>
      %26 = arith.mulf %23, %24 : vector<8x128xf32>
      %27 = vector.broadcast %25 : vector<1x128xf32> to vector<8x128xf32>
      %28 = arith.mulf %27, %26 : vector<8x128xf32>
      %c0_21 = arith.constant 0 : index
      %c0_22 = arith.constant 0 : index
      %29 = vector.load %arg7[%c0_21, %c0_22] : memref<1x128xf32, #tpu.memory_space<vmem>>, vector<1x128xf32>
      %30 = vector.broadcast %29 : vector<1x128xf32> to vector<8x128xf32>
      %31 = arith.addf %28, %30 : vector<8x128xf32>
      %c0_23 = arith.constant 0 : index
      %c0_24 = arith.constant 0 : index
      %32 = vector.load %arg8[%c0_23, %c0_24] : memref<8x128xf32, #tpu.memory_space<vmem>>, vector<8x128xf32>
      tpu.vector_store %arg8[%c0_23, %c0_24], %31 {strides = array<i32>} : memref<8x128xf32, #tpu.memory_space<vmem>>, vector<8x128xf32>,
    } else {
    }
    return
  }
  func.func @transform_0(%arg0: i32, %arg1: i32) -> (i32, i32) {
    %c0_i32 = arith.constant 0 : i32
    return %arg0, %arg1 : i32, i32
  }
  func.func @transform_1(%arg0: i32, %arg1: i32) -> (i32, i32) {
    %c0_i32 = arith.constant 0 : i32
    %c0_i32_0 = arith.constant 0 : i32
    %c0_i32_1 = arith.constant 0 : i32
    return %c0_i32, %c0_i32_0 : i32, i32
  }
  func.func @transform_2(%arg0: i32, %arg1: i32) -> (i32, i32) {
    %c0_i32 = arith.constant 0 : i32
    %c0_i32_0 = arith.constant 0 : i32
    %c0_i32_1 = arith.constant 0 : i32
    return %c0_i32, %c0_i32_0 : i32, i32
  }
  func.func @transform_3(%arg0: i32, %arg1: i32) -> (i32, i32) {
    %c0_i32 = arith.constant 0 : i32
    %c0_i32_0 = arith.constant 0 : i32
    %c0_i32_1 = arith.constant 0 : i32
    return %c0_i32, %c0_i32_0 : i32, i32
  }
  func.func @transform_4(%arg0: i32, %arg1: i32) -> (i32, i32) {
    %c0_i32 = arith.constant 0 : i32
    %c0_i32_0 = arith.constant 0 : i32
    %c0_i32_1 = arith.constant 0 : i32
    return %c0_i32, %c0_i32_0 : i32, i32
  }
  func.func @transform_5(%arg0: i32, %arg1: i32) -> (i32, i32) {
    %c0_i32 = arith.constant 0 : i32
    %c0_i32_0 = arith.constant 0 : i32
    %c0_i32_1 = arith.constant 0 : i32
    return %c0_i32, %c0_i32_0 : i32, i32
  }
  func.func @transform_6(%arg0: i32, %arg1: i32) -> (i32, i32) {
    %c0_i32 = arith.constant 0 : i32
    %c0_i32_0 = arith.constant 0 : i32
    return %arg0, %c0_i32 : i32, i32
  }
}

</mosaic_0001>

<llo_original>
// kernel: tpu_custom_call.1
$region0: #{tpu_custom_call.1}
  #allocation0 [shape = 'u32[]', space=smem, size = 0x4, offset = 0x4, fixed_abs, tag = 'smem constant byte address 0x4 - core index']
  #allocation1 [shape = 'u32[144,128]{1,0:T(1,128)}', space=vmem, size = 0x12000, scoped, tag = 'internal scratch']
  #allocation2 [shape = 'f32[8,256]{1,0:T(8,128)}', space=vmem, size = 0x2000, scoped, tag = 'scratch operand']
  %s0 = inlined_call_operand.hbm [shape: f32[16,128], index: 0, kind: input, shape index: {}]
  %s1 = inlined_call_operand.hbm [shape: f32[128,256], index: 1, kind: input, shape index: {}]
  %s2 = inlined_call_operand.hbm [shape: f32[128,128], index: 2, kind: input, shape index: {}]
  %s3 = inlined_call_operand.vmem [shape: f32[1,128], index: 3, kind: input, shape index: {}]
  %s4 = inlined_call_operand.vmem [shape: f32[1,128], index: 4, kind: input, shape index: {}]
  %s5 = inlined_call_operand.vmem [shape: f32[1,128], index: 5, kind: input, shape index: {}]
  %s6 = inlined_call_operand.hbm [shape: f32[16,128], index: 6, kind: output, shape index: {}]
  %s7 = sld [smem:[#allocation0]]
  $region77: #{tpu_custom_call.1} parent=0
    _
  %s9 = ssub.s32 1, %s7
  %s10 = scalar_select 0, %s9, %s7
  $region1: #{tpu_custom_call.1} parent=0
    #allocation3 [shape = 'u8[8192]{0}', space=vmem, size = 0x2000, scoped, tag = 'input window, operand 0']
    #allocation4 [shape = 's32[2]{0}', space=sflag, size = 0x8, scoped, tag = 'scoped memory for tpu_custom_call.1']
    #allocation5 [shape = 's32[2]{0}', space=sflag, size = 0x8, scoped, tag = 'scoped memory for tpu_custom_call.1']
    #allocation6 [shape = 'u8[131072]{0}', space=vmem, size = 0x20000, scoped, tag = 'input window, operand 1, single buffered']
    #allocation7 [shape = 's32[1]{0}', space=sflag, size = 0x4, scoped, tag = 'scoped memory for tpu_custom_call.1']
    #allocation8 [shape = 'u8[65536]{0}', space=vmem, size = 0x10000, scoped, tag = 'input window, operand 2, single buffered']
    #allocation9 [shape = 'u8[8192]{0}', space=vmem, size = 0x2000, scoped, tag = 'output window, operand 0']
    %11 = vsyncpa [#allocation4], 0
    %s12 = scalar_lea.sflag [#allocation4], 1
    %13 = vsyncpa %s12, 0
    %14 = vsyncpa [#allocation7], 0
    %15 = vsyncpa [#allocation5], 0
    %s16 = scalar_lea.sflag [#allocation5], 1
    %17 = vsyncpa %s16, 0
    loop: start=0, step=1, limit=4
    $region2: #{tpu_custom_call.1} parent=1 // loop_pre_header
      _
    $region3: #{tpu_custom_call.1} parent=1 // loop_header
      %s19 = sphi 0, %s23
      %p20 = scmp.ge.s32.totalorder %s19, 4
      %s26 = sphi 0, %s38
      %s27 = sphi 0, %s34
      %s28 = sphi 0, %s26
      %s29 = sphi 0, %s27
      %s30 = sphi 0, %s28
      %s31 = sphi 0, %s29
      %s43 = sphi 0, %s45
      %s46 = sphi 0, %s43
      %s47 = sphi 0, %s46
      %s63 = sphi 0, %s47
      %s67 = sphi 0, %s67
      %s69 = sphi 0, %s67
      %s70 = sphi 0, %s69
      %s84 = sphi 0, %s70
      %s88 = sphi 0, %s88
      %s90 = sphi 0, %s88
      %s91 = sphi 0, %s90
      %s105 = sphi 0, %s91
      %s109 = sphi 0, %s109
      %s111 = sphi 0, %s109
      %s112 = sphi 0, %s111
      %s126 = sphi 0, %s112
      %s130 = sphi 0, %s130
      %s132 = sphi 0, %s130
      %s133 = sphi 0, %s132
      %s147 = sphi 0, %s133
      %s151 = sphi 0, %s151
      %s153 = sphi 0, %s151
      %s154 = sphi 0, %s153
      %s168 = sphi 0, %s154
      %s174 = sphi 0, %s176
      %s177 = sphi 0, %s174
      %s178 = sphi 0, %s177
      %s194 = sphi 0, %s178
    $region4: #{tpu_custom_call.1} parent=1 // loop_header_branch
      %22 = sbr.rel (%p20) target = $region8
    $region5: #{tpu_custom_call.1} parent=1 // loop_body
      %s24 = ssub.s32 %s19, 1
      %s25 = ssub.s32 %s19, 2
      %s32 = sadd.s32 1, %s27
      %p33 = scmp.ge.s32.totalorder %s32, 1
      %s34 = scalar_select %p33, 0, %s32
      %s35 = sadd.s32 1, %s26
      %s36 = scalar_select %p33, %s35, %s26
      %p37 = scmp.ge.s32.totalorder %s36, 2
      %s38 = scalar_select %p37, 0, %s36
      %s39 = ssub.s32 %s26, %s38
      %s40 = ssub.s32 %s27, %s34
      %s41 = sor.u32 %s39, %s40
      %p42 = scmp.eq.s32.totalorder %s41, 0
      %s44 = sadd.s32 %s43, 1
      %s45 = scalar_select %p42, %s43, %s44
      %p48 = pneg %p42
      %p49 = scmp.eq.s32.totalorder %s19, 1
      %p50 = por %p48, %p49
      %p51 = scmp.ne.s32.totalorder %s43, %s46
      %p52 = scmp.eq.s32.totalorder %s19, 0
      %p53 = por %p51, %p52
      %p54 = scmp.ne.s32.totalorder %s43, %s46
      %p55 = scmp.eq.s32.totalorder %s24, 1
      %p56 = por %p54, %p55
      %p57 = scmp.ne.s32.totalorder %s46, %s47
      %p58 = scmp.eq.s32.totalorder %s24, 0
      %p59 = por %p57, %p58
      %p60 = scmp.ne.s32.totalorder %s46, %s47
      %p61 = scmp.eq.s32.totalorder %s25, 1
      %p62 = por %p60, %p61
      %p64 = scmp.ne.s32.totalorder %s47, %s63
      %p65 = scmp.eq.s32.totalorder %s25, 0
      %p66 = por %p64, %p65
      %s68 = sadd.s32 %s67, 1
      %p71 = scmp.eq.s32.totalorder %s19, 1
      %p72 = scmp.ne.s32.totalorder %s67, %s69
      %p73 = scmp.eq.s32.totalorder %s19, 0
      %p74 = por %p72, %p73
      %p75 = scmp.ne.s32.totalorder %s67, %s69
      %p76 = scmp.eq.s32.totalorder %s24, 1
      %p77 = por %p75, %p76
      %p78 = scmp.ne.s32.totalorder %s69, %s70
      %p79 = scmp.eq.s32.totalorder %s24, 0
      %p80 = por %p78, %p79
      %p81 = scmp.ne.s32.totalorder %s69, %s70
      %p82 = scmp.eq.s32.totalorder %s25, 1
      %p83 = por %p81, %p82
      %p85 = scmp.ne.s32.totalorder %s70, %s84
      %p86 = scmp.eq.s32.totalorder %s25, 0
      %p87 = por %p85, %p86
      %s89 = sadd.s32 %s88, 1
      %p92 = scmp.eq.s32.totalorder %s19, 1
      %p93 = scmp.ne.s32.totalorder %s88, %s90
      %p94 = scmp.eq.s32.totalorder %s19, 0
      %p95 = por %p93, %p94
      %p96 = scmp.ne.s32.totalorder %s88, %s90
      %p97 = scmp.eq.s32.totalorder %s24, 1
      %p98 = por %p96, %p97
      %p99 = scmp.ne.s32.totalorder %s90, %s91
      %p100 = scmp.eq.s32.totalorder %s24, 0
      %p101 = por %p99, %p100
      %p102 = scmp.ne.s32.totalorder %s90, %s91
      %p103 = scmp.eq.s32.totalorder %s25, 1
      %p104 = por %p102, %p103
      %p106 = scmp.ne.s32.totalorder %s91, %s105
      %p107 = scmp.eq.s32.totalorder %s25, 0
      %p108 = por %p106, %p107
      %s110 = sadd.s32 %s109, 1
      %p113 = scmp.eq.s32.totalorder %s19, 1
      %p114 = scmp.ne.s32.totalorder %s109, %s111
      %p115 = scmp.eq.s32.totalorder %s19, 0
      %p116 = por %p114, %p115
      %p117 = scmp.ne.s32.totalorder %s109, %s111
      %p118 = scmp.eq.s32.totalorder %s24, 1
      %p119 = por %p117, %p118
      %p120 = scmp.ne.s32.totalorder %s111, %s112
      %p121 = scmp.eq.s32.totalorder %s24, 0
      %p122 = por %p120, %p121
      %p123 = scmp.ne.s32.totalorder %s111, %s112
      %p124 = scmp.eq.s32.totalorder %s25, 1
      %p125 = por %p123, %p124
      %p127 = scmp.ne.s32.totalorder %s112, %s126
      %p128 = scmp.eq.s32.totalorder %s25, 0
      %p129 = por %p127, %p128
      %s131 = sadd.s32 %s130, 1
      %p134 = scmp.eq.s32.totalorder %s19, 1
      %p135 = scmp.ne.s32.totalorder %s130, %s132
      %p136 = scmp.eq.s32.totalorder %s19, 0
      %p137 = por %p135, %p136
      %p138 = scmp.ne.s32.totalorder %s130, %s132
      %p139 = scmp.eq.s32.totalorder %s24, 1
      %p140 = por %p138, %p139
      %p141 = scmp.ne.s32.totalorder %s132, %s133
      %p142 = scmp.eq.s32.totalorder %s24, 0
      %p143 = por %p141, %p142
      %p144 = scmp.ne.s32.totalorder %s132, %s133
      %p145 = scmp.eq.s32.totalorder %s25, 1
      %p146 = por %p144, %p145
      %p148 = scmp.ne.s32.totalorder %s133, %s147
      %p149 = scmp.eq.s32.totalorder %s25, 0
      %p150 = por %p148, %p149
      %s152 = sadd.s32 %s151, 1
      %p155 = scmp.eq.s32.totalorder %s19, 1
      %p156 = scmp.ne.s32.totalorder %s151, %s153
      %p157 = scmp.eq.s32.totalorder %s19, 0
      %p158 = por %p156, %p157
      %p159 = scmp.ne.s32.totalorder %s151, %s153
      %p160 = scmp.eq.s32.totalorder %s24, 1
      %p161 = por %p159, %p160
      %p162 = scmp.ne.s32.totalorder %s153, %s154
      %p163 = scmp.eq.s32.totalorder %s24, 0
      %p164 = por %p162, %p163
      %p165 = scmp.ne.s32.totalorder %s153, %s154
      %p166 = scmp.eq.s32.totalorder %s25, 1
      %p167 = por %p165, %p166
      %p169 = scmp.ne.s32.totalorder %s154, %s168
      %p170 = scmp.eq.s32.totalorder %s25, 0
      %p171 = por %p169, %p170
      %s172 = ssub.s32 %s26, %s38
      %p173 = scmp.eq.s32.totalorder %s172, 0
      %s175 = sadd.s32 %s174, 1
      %s176 = scalar_select %p173, %s174, %s175
      %p179 = pneg %p173
      %p180 = scmp.eq.s32.totalorder %s19, 1
      %p181 = por %p179, %p180
      %p182 = scmp.ne.s32.totalorder %s174, %s177
      %p183 = scmp.eq.s32.totalorder %s19, 0
      %p184 = por %p182, %p183
      %p185 = scmp.ne.s32.totalorder %s174, %s177
      %p186 = scmp.eq.s32.totalorder %s24, 1
      %p187 = por %p185, %p186
      %p188 = scmp.ne.s32.totalorder %s177, %s178
      %p189 = scmp.eq.s32.totalorder %s24, 0
      %p190 = por %p188, %p189
      %p191 = scmp.ne.s32.totalorder %s177, %s178
      %p192 = scmp.eq.s32.totalorder %s25, 1
      %p193 = por %p191, %p192
      %p195 = scmp.ne.s32.totalorder %s178, %s194
      %p196 = scmp.eq.s32.totalorder %s25, 0
      %p197 = por %p195, %p196
      %p198 = scmp.le.s32.totalorder 1, %s19
      %p199 = scmp.lt.s32.totalorder %s19, 3
      %p200 = pnand %p198, %p199
      %p201 = pneg %p200
      // Predicated region
      $region9: #{tpu_custom_call.1} parent=5 // pred_check
        _
      $region10: #{tpu_custom_call.1} parent=5 // pred_check_branch
        %203 = sbr.rel (%p200) target = $region12
      $region11: #{tpu_custom_call.1} parent=5 // pred_region
        %s204 = ssub.s32 %s19, 1
        // Predicated region
        $region13: #{tpu_custom_call.1} parent=11 // pred_check
          %p205 = pneg %p80
        $region14: #{tpu_custom_call.1} parent=11 // pred_check_branch
          %207 = sbr.rel (%p205) target = $region16
        $region15: #{tpu_custom_call.1} parent=11 // pred_region
          %s209 = ssub.s32 4096, 4096
          %210 = vsyncadd [#allocation7], %s209
          %s211 = sshll.u32 [#allocation6], 4
          %s212 = int_to_ptr.vmem [resolvable:$true] %s211
          %217 = dma.hbm_to_vmem [thread:$0]  %s1, 4096, %s212, [#allocation7], 256, 256, 16
        $region16: #{tpu_custom_call.1} parent=11 // pred_fallthru
          _
        // Predicated region
        $region17: #{tpu_custom_call.1} parent=11 // pred_check
          %p218 = pneg %p101
        $region18: #{tpu_custom_call.1} parent=11 // pred_check_branch
          %220 = sbr.rel (%p218) target = $region20
        $region19: #{tpu_custom_call.1} parent=11 // pred_region
          %s222 = ssub.s32 2048, 2048
          %223 = vsyncadd [#allocation7], %s222
          %s224 = sshll.u32 [#allocation8], 4
          %s225 = int_to_ptr.vmem [resolvable:$true] %s224
          %230 = dma.hbm_to_vmem [thread:$0]  %s2, 2048, %s225, [#allocation7], 128, 128, 8
        $region20: #{tpu_custom_call.1} parent=11 // pred_fallthru
          _
        // Predicated region
        $region21: #{tpu_custom_call.1} parent=11 // pred_check
          %p231 = pneg %p122
        $region22: #{tpu_custom_call.1} parent=11 // pred_check_branch
          %233 = sbr.rel (%p231) target = $region24
        $region23: #{tpu_custom_call.1} parent=11 // pred_region
          _
        $region24: #{tpu_custom_call.1} parent=11 // pred_fallthru
          _
        // Predicated region
        $region25: #{tpu_custom_call.1} parent=11 // pred_check
          %p234 = pneg %p143
        $region26: #{tpu_custom_call.1} parent=11 // pred_check_branch
          %236 = sbr.rel (%p234) target = $region28
        $region27: #{tpu_custom_call.1} parent=11 // pred_region
          _
        $region28: #{tpu_custom_call.1} parent=11 // pred_fallthru
          _
        // Predicated region
        $region29: #{tpu_custom_call.1} parent=11 // pred_check
          %p237 = pneg %p164
        $region30: #{tpu_custom_call.1} parent=11 // pred_check_branch
          %239 = sbr.rel (%p237) target = $region32
        $region31: #{tpu_custom_call.1} parent=11 // pred_region
          _
        $region32: #{tpu_custom_call.1} parent=11 // pred_fallthru
          _
      $region12: #{tpu_custom_call.1} parent=5 // pred_fallthru
        _
      %p240 = scmp.lt.s32.totalorder %s19, 2
      // Predicated region
      $region33: #{tpu_custom_call.1} parent=5 // pred_check
        %p241 = pneg %p240
      $region34: #{tpu_custom_call.1} parent=5 // pred_check_branch
        %243 = sbr.rel (%p241) target = $region36
      $region35: #{tpu_custom_call.1} parent=5 // pred_region
        // Predicated region
        $region37: #{tpu_custom_call.1} parent=35 // pred_check
          %p244 = pneg %p53
        $region38: #{tpu_custom_call.1} parent=35 // pred_check_branch
          %246 = sbr.rel (%p244) target = $region40
        $region39: #{tpu_custom_call.1} parent=35 // pred_region
          %s247 = sand.u32 %s43, 1
          %s248 = scalar_lea.sflag [#allocation4], %s247
          %s249 = sand.u32 %s43, 1
          %s250 = smul.addr %s249, 8
          %s251 = scalar_lea.vmem [#allocation3], %s250
          %s253 = ssub.s32 128, 128
          %254 = vsyncadd %s248, %s253
          %s255 = sadd.s32 %s27, %s26
          %s256 = smul.addr %s255, 128
          %s257 = scalar_lea.hbm %s0, %s256
          %s259 = sshll.u32 %s251, 4
          %s260 = int_to_ptr.vmem [resolvable:$true] %s259
          %262 = dma.hbm_to_vmem [thread:$0]  %s257, 128, %s260, %s248
        $region40: #{tpu_custom_call.1} parent=35 // pred_fallthru
          _
      $region36: #{tpu_custom_call.1} parent=5 // pred_fallthru
        _
      %p263 = scmp.le.s32.totalorder 1, %s19
      %p264 = scmp.lt.s32.totalorder %s19, 3
      %p265 = pnand %p263, %p264
      %p266 = pneg %p265
      // Predicated region
      $region41: #{tpu_custom_call.1} parent=5 // pred_check
        _
      $region42: #{tpu_custom_call.1} parent=5 // pred_check_branch
        %268 = sbr.rel (%p265) target = $region44
      $region43: #{tpu_custom_call.1} parent=5 // pred_region
        %s269 = ssub.s32 %s19, 1
        %s270 = sand.u32 %s46, 1
        %s271 = scalar_lea.sflag [#allocation4], %s270
        %s272 = sand.u32 %s46, 1
        %s273 = smul.addr %s272, 8
        %s274 = scalar_lea.vmem [#allocation3], %s273
        // Predicated region
        $region45: #{tpu_custom_call.1} parent=43 // pred_check
          %p275 = pneg %p59
        $region46: #{tpu_custom_call.1} parent=43 // pred_check_branch
          %277 = sbr.rel (%p275) target = $region48
        $region47: #{tpu_custom_call.1} parent=43 // pred_region
          %278 = dma.done %s271, 128
        $region48: #{tpu_custom_call.1} parent=43 // pred_fallthru
          _
        // Predicated region
        $region49: #{tpu_custom_call.1} parent=43 // pred_check
          %p279 = pneg %p80
        $region50: #{tpu_custom_call.1} parent=43 // pred_check_branch
          %281 = sbr.rel (%p279) target = $region52
        $region51: #{tpu_custom_call.1} parent=43 // pred_region
          %282 = dma.done [#allocation7], 4096
        $region52: #{tpu_custom_call.1} parent=43 // pred_fallthru
          _
        // Predicated region
        $region53: #{tpu_custom_call.1} parent=43 // pred_check
          %p283 = pneg %p101
        $region54: #{tpu_custom_call.1} parent=43 // pred_check_branch
          %285 = sbr.rel (%p283) target = $region56
        $region55: #{tpu_custom_call.1} parent=43 // pred_region
          %286 = dma.done [#allocation7], 2048
        $region56: #{tpu_custom_call.1} parent=43 // pred_fallthru
          _
        %s287 = sand.u32 %s46, 1
        %s288 = scalar_lea.sflag [#allocation4], %s287
        %s289 = sand.u32 %s46, 1
        %s290 = smul.addr %s289, 8
        %s291 = scalar_lea.vmem [#allocation3], %s290
        %p292 = pneg %p59
        %p293 = pneg %p56
        %p294 = pneg %p80
        %p295 = pneg %p77
        %p296 = pneg %p101
        %p297 = pneg %p98
        %p298 = pneg %p122
        %p299 = pneg %p119
        %p300 = pneg %p143
        %p301 = pneg %p140
        %p302 = pneg %p164
        %p303 = pneg %p161
        %p304 = pneg %p190
        %p305 = pneg %p187
        %s306 = sand.u32 %s177, 1
        %s307 = scalar_lea.sflag [#allocation5], %s306
        %s308 = sand.u32 %s177, 1
        %s309 = smul.addr %s308, 8
        %s310 = scalar_lea.vmem [#allocation9], %s309
        %p311 = scmp.eq.s32.totalorder %s29, 0
        // Predicated region
        $region57: #{tpu_custom_call.1} parent=43 // pred_check
          %p312 = pneg %p311
        $region58: #{tpu_custom_call.1} parent=43 // pred_check_branch
          %314 = sbr.rel (%p312) target = $region60
        $region59: #{tpu_custom_call.1} parent=43 // pred_region
          %315 = vst [vmem:[#allocation2] sm:$0xff] 0.0
          %316 = vst [vmem:[#allocation2 + $0x8] sm:$0xff] 0.0
        $region60: #{tpu_custom_call.1} parent=43 // pred_fallthru
          _
        %v317 = vld [vmem:[#allocation2] sm:$0xff]
        %v318 = vld [vmem:[#allocation2 + $0x8] sm:$0xff]
        %v319 = vld [vmem:[%s274] sm:$0xff]
        %v320 = vld [vmem:[#allocation6] sm:$0xff]
        %v321 = vld [vmem:[#allocation6 + $0x8] sm:$0xff]
        %v322 = vld [vmem:[#allocation6 + $0x10] sm:$0xff]
        %v323 = vld [vmem:[#allocation6 + $0x18] sm:$0xff]
        %v324 = vld [vmem:[#allocation6 + $0x20] sm:$0xff]
        %v325 = vld [vmem:[#allocation6 + $0x28] sm:$0xff]
        %v326 = vld [vmem:[#allocation6 + $0x30] sm:$0xff]
        %v327 = vld [vmem:[#allocation6 + $0x38] sm:$0xff]
        %v328 = vld [vmem:[#allocation6 + $0x40] sm:$0xff]
        %v329 = vld [vmem:[#allocation6 + $0x48] sm:$0xff]
        %v330 = vld [vmem:[#allocation6 + $0x50] sm:$0xff]
        %v331 = vld [vmem:[#allocation6 + $0x58] sm:$0xff]
        %v332 = vld [vmem:[#allocation6 + $0x60] sm:$0xff]
        %v333 = vld [vmem:[#allocation6 + $0x68] sm:$0xff]
        %v334 = vld [vmem:[#allocation6 + $0x70] sm:$0xff]
        %v335 = vld [vmem:[#allocation6 + $0x78] sm:$0xff]
        %v336 = vld [vmem:[#allocation6 + $0x80] sm:$0xff]
        %v337 = vld [vmem:[#allocation6 + $0x88] sm:$0xff]
        %v338 = vld [vmem:[#allocation6 + $0x90] sm:$0xff]
        %v339 = vld [vmem:[#allocation6 + $0x98] sm:$0xff]
        %v340 = vld [vmem:[#allocation6 + $0xa0] sm:$0xff]
        %v341 = vld [vmem:[#allocation6 + $0xa8] sm:$0xff]
        %v342 = vld [vmem:[#allocation6 + $0xb0] sm:$0xff]
        %v343 = vld [vmem:[#allocation6 + $0xb8] sm:$0xff]
        %v344 = vld [vmem:[#allocation6 + $0xc0] sm:$0xff]
        %v345 = vld [vmem:[#allocation6 + $0xc8] sm:$0xff]
        %v346 = vld [vmem:[#allocation6 + $0xd0] sm:$0xff]
        %v347 = vld [vmem:[#allocation6 + $0xd8] sm:$0xff]
        %v348 = vld [vmem:[#allocation6 + $0xe0] sm:$0xff]
        %v349 = vld [vmem:[#allocation6 + $0xe8] sm:$0xff]
        %v350 = vld [vmem:[#allocation6 + $0xf0] sm:$0xff]
        %v351 = vld [vmem:[#allocation6 + $0xf8] sm:$0xff]
        %352 = vmatprep.subr.mxu0 %v351
        %353 = vmatpush1.msra.mxu0 %v350
        %354 = vmatprep.subr.mxu0 %v349
        %355 = vmatpush1.msra.mxu0 %v348
        %356 = vmatprep.subr.mxu0 %v347
        %357 = vmatpush1.msra.mxu0 %v346
        %358 = vmatprep.subr.mxu0 %v345
        %359 = vmatpush1.msra.mxu0 %v344
        %360 = vmatprep.subr.mxu0 %v343
        %361 = vmatpush1.msra.mxu0 %v342
        %362 = vmatprep.subr.mxu0 %v341
        %363 = vmatpush1.msra.mxu0 %v340
        %364 = vmatprep.subr.mxu0 %v339
        %365 = vmatpush1.msra.mxu0 %v338
        %366 = vmatprep.subr.mxu0 %v337
        %367 = vmatpush1.msra.mxu0 %v336
        %368 = vmatprep.subr.mxu0 %v335
        %369 = vmatpush1.msra.mxu0 %v334
        %370 = vmatprep.subr.mxu0 %v333
        %371 = vmatpush1.msra.mxu0 %v332
        %372 = vmatprep.subr.mxu0 %v331
        %373 = vmatpush1.msra.mxu0 %v330
        %374 = vmatprep.subr.mxu0 %v329
        %375 = vmatpush1.msra.mxu0 %v328
        %376 = vmatprep.subr.mxu0 %v327
        %377 = vmatpush1.msra.mxu0 %v326
        %378 = vmatprep.subr.mxu0 %v325
        %379 = vmatpush1.msra.mxu0 %v324
        %380 = vmatprep.subr.mxu0 %v323
        %381 = vmatpush1.msra.mxu0 %v322
        %382 = vmatprep.subr.mxu0 %v321
        %383 = vmatpush1.msra.mxu0 %v320
        %384 = vmatprep.subr.mxu0 0.0
        %385 = vmatpush2.msra.mxu0 0.0
        %386 = vmatprep.subr.mxu0 0.0
        %387 = vmatpush2.msra.mxu0 0.0
        %388 = vmatprep.subr.mxu0 0.0
        %389 = vmatpush2.msra.mxu0 0.0
        %390 = vmatprep.subr.mxu0 0.0
        %391 = vmatpush2.msra.mxu0 0.0
        %392 = vmatprep.subr.mxu0 0.0
        %393 = vmatpush2.msra.mxu0 0.0
        %394 = vmatprep.subr.mxu0 0.0
        %395 = vmatpush2.msra.mxu0 0.0
        %396 = vmatprep.subr.mxu0 0.0
        %397 = vmatpush2.msra.mxu0 0.0
        %398 = vmatprep.subr.mxu0 0.0
        %399 = vmatpush2.msra.mxu0 0.0
        %400 = vmatprep.subr.mxu0 0.0
        %401 = vmatpush2.msra.mxu0 0.0
        %402 = vmatprep.subr.mxu0 0.0
        %403 = vmatpush2.msra.mxu0 0.0
        %404 = vmatprep.subr.mxu0 0.0
        %405 = vmatpush2.msra.mxu0 0.0
        %406 = vmatprep.subr.mxu0 0.0
        %407 = vmatpush2.msra.mxu0 0.0
        %408 = vmatprep.subr.mxu0 0.0
        %409 = vmatpush2.msra.mxu0 0.0
        %410 = vmatprep.subr.mxu0 0.0
        %411 = vmatpush2.msra.mxu0 0.0
        %412 = vmatprep.subr.mxu0 0.0
        %413 = vmatpush2.msra.mxu0 0.0
        %414 = vmatprep.subr.mxu0 0.0
        %415 = vmatpush2.msra.mxu0 0.0
        %416 = vmatprep.mubr.f32.mxu0 0.0
        %417 = vmatmul.mubr.f32.gmra.mxu0 %v319
        %v418 = vpop.f32.mrf.mxu0
        %v419 = vadd.f32 0.0, %v418
        %v420 = vpop.f32.mrf.mxu0
        %v421 = vadd.f32 0.0, %v420
        %422 = vdwg.mxu0
        %v423 = vadd.f32 %v317, %v419
        %v424 = vadd.f32 %v318, %v421
        %425 = vst [vmem:[#allocation2] sm:$0xff] %v423
        %426 = vst [vmem:[#allocation2 + $0x8] sm:$0xff] %v424
        // Predicated region
        $region61: #{tpu_custom_call.1} parent=43 // pred_check
          %p427 = pneg %p311
        $region62: #{tpu_custom_call.1} parent=43 // pred_check_branch
          %429 = sbr.rel (%p427) target = $region64
        $region63: #{tpu_custom_call.1} parent=43 // pred_region
          %v430 = vld [vmem:[#allocation2] sm:$0xff]
          %v431 = vld [vmem:[#allocation2 + $0x8] sm:$0xff]
          %v432 = vld [vmem:[#allocation8] sm:$0xff]
          %v433 = vld [vmem:[#allocation8 + $0x8] sm:$0xff]
          %v434 = vld [vmem:[#allocation8 + $0x10] sm:$0xff]
          %v435 = vld [vmem:[#allocation8 + $0x18] sm:$0xff]
          %v436 = vld [vmem:[#allocation8 + $0x20] sm:$0xff]
          %v437 = vld [vmem:[#allocation8 + $0x28] sm:$0xff]
          %v438 = vld [vmem:[#allocation8 + $0x30] sm:$0xff]
          %v439 = vld [vmem:[#allocation8 + $0x38] sm:$0xff]
          %v440 = vld [vmem:[#allocation8 + $0x40] sm:$0xff]
          %v441 = vld [vmem:[#allocation8 + $0x48] sm:$0xff]
          %v442 = vld [vmem:[#allocation8 + $0x50] sm:$0xff]
          %v443 = vld [vmem:[#allocation8 + $0x58] sm:$0xff]
          %v444 = vld [vmem:[#allocation8 + $0x60] sm:$0xff]
          %v445 = vld [vmem:[#allocation8 + $0x68] sm:$0xff]
          %v446 = vld [vmem:[#allocation8 + $0x70] sm:$0xff]
          %v447 = vld [vmem:[#allocation8 + $0x78] sm:$0xff]
          %448 = vmatprep.subr.mxu0 0.0
          %449 = vmatpush1.msra.mxu0 %v447
          %450 = vmatprep.subr.mxu0 0.0
          %451 = vmatpush1.msra.mxu0 %v446
          %452 = vmatprep.subr.mxu0 0.0
          %453 = vmatpush1.msra.mxu0 %v445
          %454 = vmatprep.subr.mxu0 0.0
          %455 = vmatpush1.msra.mxu0 %v444
          %456 = vmatprep.subr.mxu0 0.0
          %457 = vmatpush1.msra.mxu0 %v443
          %458 = vmatprep.subr.mxu0 0.0
          %459 = vmatpush1.msra.mxu0 %v442
          %460 = vmatprep.subr.mxu0 0.0
          %461 = vmatpush1.msra.mxu0 %v441
          %462 = vmatprep.subr.mxu0 0.0
          %463 = vmatpush1.msra.mxu0 %v440
          %464 = vmatprep.subr.mxu0 0.0
          %465 = vmatpush1.msra.mxu0 %v439
          %466 = vmatprep.subr.mxu0 0.0
          %467 = vmatpush1.msra.mxu0 %v438
          %468 = vmatprep.subr.mxu0 0.0
          %469 = vmatpush1.msra.mxu0 %v437
          %470 = vmatprep.subr.mxu0 0.0
          %471 = vmatpush1.msra.mxu0 %v436
          %472 = vmatprep.subr.mxu0 0.0
          %473 = vmatpush1.msra.mxu0 %v435
          %474 = vmatprep.subr.mxu0 0.0
          %475 = vmatpush1.msra.mxu0 %v434
          %476 = vmatprep.subr.mxu0 0.0
          %477 = vmatpush1.msra.mxu0 %v433
          %478 = vmatprep.subr.mxu0 0.0
          %479 = vmatpush1.msra.mxu0 %v432
          %480 = vmatprep.subr.mxu0 0.0
          %481 = vmatpush2.msra.mxu0 0.0
          %482 = vmatprep.subr.mxu0 0.0
          %483 = vmatpush2.msra.mxu0 0.0
          %484 = vmatprep.subr.mxu0 0.0
          %485 = vmatpush2.msra.mxu0 0.0
          %486 = vmatprep.subr.mxu0 0.0
          %487 = vmatpush2.msra.mxu0 0.0
          %488 = vmatprep.subr.mxu0 0.0
          %489 = vmatpush2.msra.mxu0 0.0
          %490 = vmatprep.subr.mxu0 0.0
          %491 = vmatpush2.msra.mxu0 0.0
          %492 = vmatprep.subr.mxu0 0.0
          %493 = vmatpush2.msra.mxu0 0.0
          %494 = vmatprep.subr.mxu0 0.0
          %495 = vmatpush2.msra.mxu0 0.0
          %496 = vmatprep.subr.mxu0 0.0
          %497 = vmatpush2.msra.mxu0 0.0
          %498 = vmatprep.subr.mxu0 0.0
          %499 = vmatpush2.msra.mxu0 0.0
          %500 = vmatprep.subr.mxu0 0.0
          %501 = vmatpush2.msra.mxu0 0.0
          %502 = vmatprep.subr.mxu0 0.0
          %503 = vmatpush2.msra.mxu0 0.0
          %504 = vmatprep.subr.mxu0 0.0
          %505 = vmatpush2.msra.mxu0 0.0
          %506 = vmatprep.subr.mxu0 0.0
          %507 = vmatpush2.msra.mxu0 0.0
          %508 = vmatprep.subr.mxu0 0.0
          %509 = vmatpush2.msra.mxu0 0.0
          %510 = vmatprep.subr.mxu0 0.0
          %511 = vmatpush2.msra.mxu0 0.0
          %512 = vmatprep.mubr.f32.mxu0 0.0
          %513 = vmatmul.mubr.f32.gmra.mxu0 %v431
          %v514 = vpop.f32.mrf.mxu0
          %v515 = vadd.f32 0.0, %v514
          %v516 = vpop.f32.mrf.mxu0
          %517 = vdwg.mxu0
          %v518 = vld [vmem:[%s3] sm:$0x1]
          %v520 = vlaneseq
          %v521 = vshrl.u32 %v520, 7
          %v522 = vsub.s32 0, %v521
          %v523 = vrot.slane %v518, %v522
          %v525 = vmul.f32 %v431, %v523
          %526 = vmatprep.subr.mxu0 0.0
          %527 = vmatpush1.msra.mxu0 %v447
          %528 = vmatprep.subr.mxu0 0.0
          %529 = vmatpush1.msra.mxu0 %v446
          %530 = vmatprep.subr.mxu0 0.0
          %531 = vmatpush1.msra.mxu0 %v445
          %532 = vmatprep.subr.mxu0 0.0
          %533 = vmatpush1.msra.mxu0 %v444
          %534 = vmatprep.subr.mxu0 0.0
          %535 = vmatpush1.msra.mxu0 %v443
          %536 = vmatprep.subr.mxu0 0.0
          %537 = vmatpush1.msra.mxu0 %v442
          %538 = vmatprep.subr.mxu0 0.0
          %539 = vmatpush1.msra.mxu0 %v441
          %540 = vmatprep.subr.mxu0 0.0
          %541 = vmatpush1.msra.mxu0 %v440
          %542 = vmatprep.subr.mxu0 0.0
          %543 = vmatpush1.msra.mxu0 %v439
          %544 = vmatprep.subr.mxu0 0.0
          %545 = vmatpush1.msra.mxu0 %v438
          %546 = vmatprep.subr.mxu0 0.0
          %547 = vmatpush1.msra.mxu0 %v437
          %548 = vmatprep.subr.mxu0 0.0
          %549 = vmatpush1.msra.mxu0 %v436
          %550 = vmatprep.subr.mxu0 0.0
          %551 = vmatpush1.msra.mxu0 %v435
          %552 = vmatprep.subr.mxu0 0.0
          %553 = vmatpush1.msra.mxu0 %v434
          %554 = vmatprep.subr.mxu0 0.0
          %555 = vmatpush1.msra.mxu0 %v433
          %556 = vmatprep.subr.mxu0 0.0
          %557 = vmatpush1.msra.mxu0 %v432
          %558 = vmatprep.subr.mxu0 0.0
          %559 = vmatpush2.msra.mxu0 0.0
          %560 = vmatprep.subr.mxu0 0.0
          %561 = vmatpush2.msra.mxu0 0.0
          %562 = vmatprep.subr.mxu0 0.0
          %563 = vmatpush2.msra.mxu0 0.0
          %564 = vmatprep.subr.mxu0 0.0
          %565 = vmatpush2.msra.mxu0 0.0
          %566 = vmatprep.subr.mxu0 0.0
          %567 = vmatpush2.msra.mxu0 0.0
          %568 = vmatprep.subr.mxu0 0.0
          %569 = vmatpush2.msra.mxu0 0.0
          %570 = vmatprep.subr.mxu0 0.0
          %571 = vmatpush2.msra.mxu0 0.0
          %572 = vmatprep.subr.mxu0 0.0
          %573 = vmatpush2.msra.mxu0 0.0
          %574 = vmatprep.subr.mxu0 0.0
          %575 = vmatpush2.msra.mxu0 0.0
          %576 = vmatprep.subr.mxu0 0.0
          %577 = vmatpush2.msra.mxu0 0.0
          %578 = vmatprep.subr.mxu0 0.0
          %579 = vmatpush2.msra.mxu0 0.0
          %580 = vmatprep.subr.mxu0 0.0
          %581 = vmatpush2.msra.mxu0 0.0
          %582 = vmatprep.subr.mxu0 0.0
          %583 = vmatpush2.msra.mxu0 0.0
          %584 = vmatprep.subr.mxu0 0.0
          %585 = vmatpush2.msra.mxu0 0.0
          %586 = vmatprep.subr.mxu0 0.0
          %587 = vmatpush2.msra.mxu0 0.0
          %588 = vmatprep.subr.mxu0 0.0
          %589 = vmatpush2.msra.mxu0 0.0
          %590 = vmatprep.mubr.f32.mxu0 0.0
          %591 = vmatmul.mubr.f32.gmra.mxu0 %v525
          %v592 = vpop.f32.mrf.mxu0
          %v593 = vadd.f32 1e-08, %v592
          %v594 = vpop.f32.mrf.mxu0
          %595 = vdwg.mxu0
          %v596 = vsub.f32 %v430, %v515
          %v597 = vrcp.pop %v593
          %v598 = vld [vmem:[%s4] sm:$0x1]
          %v599 = vmul.f32 %v596, %v597
          %v601 = vlaneseq
          %v602 = vshrl.u32 %v601, 7
          %v603 = vsub.s32 0, %v602
          %v604 = vrot.slane %v598, %v603
          %v606 = vmul.f32 %v604, %v599
          %v607 = vld [vmem:[%s5] sm:$0x1]
          %v609 = vlaneseq
          %v610 = vshrl.u32 %v609, 7
          %v611 = vsub.s32 0, %v610
          %v612 = vrot.slane %v607, %v611
          %v614 = vadd.f32 %v606, %v612
          %615 = vst [vmem:[%s310] sm:$0xff] %v614
        $region64: #{tpu_custom_call.1} parent=43 // pred_fallthru
          _
        %s616 = sand.u32 %s177, 1
        %s617 = scalar_lea.sflag [#allocation5], %s616
        %s618 = sand.u32 %s177, 1
        %s619 = smul.addr %s618, 8
        %s620 = scalar_lea.vmem [#allocation9], %s619
        // Predicated region
        $region65: #{tpu_custom_call.1} parent=43 // pred_check
          %p621 = pneg %p187
        $region66: #{tpu_custom_call.1} parent=43 // pred_check_branch
          %623 = sbr.rel (%p621) target = $region68
        $region67: #{tpu_custom_call.1} parent=43 // pred_region
          %s625 = ssub.s32 128, 128
          %626 = vsyncadd %s617, %s625
          %s627 = smul.addr %s28, 128
          %s628 = scalar_lea.hbm %s6, %s627
          %s630 = sshll.u32 %s620, 4
          %s631 = int_to_ptr.vmem [resolvable:$true] %s630
          %633 = dma.vmem_to_hbm [thread:$0]  %s631, 128, %s628, %s617
        $region68: #{tpu_custom_call.1} parent=43 // pred_fallthru
          _
      $region44: #{tpu_custom_call.1} parent=5 // pred_fallthru
        _
      %p634 = scmp.le.s32.totalorder 2, %s19
      // Predicated region
      $region69: #{tpu_custom_call.1} parent=5 // pred_check
        %p635 = pneg %p634
      $region70: #{tpu_custom_call.1} parent=5 // pred_check_branch
        %637 = sbr.rel (%p635) target = $region72
      $region71: #{tpu_custom_call.1} parent=5 // pred_region
        %s638 = ssub.s32 %s19, 2
        // Predicated region
        $region73: #{tpu_custom_call.1} parent=71 // pred_check
          %p639 = pneg %p193
        $region74: #{tpu_custom_call.1} parent=71 // pred_check_branch
          %641 = sbr.rel (%p639) target = $region76
        $region75: #{tpu_custom_call.1} parent=71 // pred_region
          %s642 = sand.u32 %s178, 1
          %s643 = scalar_lea.sflag [#allocation5], %s642
          %s644 = sand.u32 %s178, 1
          %s645 = smul.addr %s644, 8
          %s646 = scalar_lea.vmem [#allocation9], %s645
          %647 = dma.done %s643, 128
        $region76: #{tpu_custom_call.1} parent=71 // pred_fallthru
          _
      $region72: #{tpu_custom_call.1} parent=5 // pred_fallthru
        _
    $region6: #{tpu_custom_call.1} parent=1 // loop_footer
      %s23 = sadd.s32 1, %s19
    $region7: #{tpu_custom_call.1} parent=1 // loop_footer_branch
      %18 = sbr.rel target = $region3
    $region8: #{tpu_custom_call.1} parent=1 // loop_exit
      _
    %648 = vsyncpa [#allocation4], 1
    %s649 = scalar_lea.sflag [#allocation4], 1
    %650 = vsyncpa %s649, 1
    %651 = vsyncpa [#allocation7], 1
    %652 = vsyncpa [#allocation5], 1
    %s653 = scalar_lea.sflag [#allocation5], 1
    %654 = vsyncpa %s653, 1

// kernel: tpu_custom_call.1
$region0: #{tpu_custom_call.1}
  #allocation0 [shape = 'u32[]', space=smem, size = 0x4, offset = 0x4, fixed_abs, tag = 'smem constant byte address 0x4 - core index']
  #allocation1 [shape = 'u32[144,128]{1,0:T(1,128)}', space=vmem, size = 0x12000, scoped, tag = 'internal scratch']
  #allocation2 [shape = 'f32[8,256]{1,0:T(8,128)}', space=vmem, size = 0x2000, scoped, tag = 'scratch operand']
  %s0 = inlined_call_operand.hbm [shape: f32[16,128], index: 0, kind: input, shape index: {}]
  %s1 = inlined_call_operand.hbm [shape: f32[128,256], index: 1, kind: input, shape index: {}]
  %s2 = inlined_call_operand.hbm [shape: f32[128,128], index: 2, kind: input, shape index: {}]
  %s3 = inlined_call_operand.vmem [shape: f32[1,128], index: 3, kind: input, shape index: {}]
  %s4 = inlined_call_operand.vmem [shape: f32[1,128], index: 4, kind: input, shape index: {}]
  %s5 = inlined_call_operand.vmem [shape: f32[1,128], index: 5, kind: input, shape index: {}]
  %s6 = inlined_call_operand.hbm [shape: f32[16,128], index: 6, kind: output, shape index: {}]
  %s7 = sld [smem:[#allocation0]]
  $region77: #{tpu_custom_call.1} parent=0
    _
  %s9 = ssub.s32 1, %s7
  %s10 = scalar_select 0, %s9, %s7
  $region1: #{tpu_custom_call.1} parent=0
    #allocation3 [shape = 'u8[8192]{0}', space=vmem, size = 0x2000, scoped, tag = 'input window, operand 0']
    #allocation4 [shape = 's32[2]{0}', space=sflag, size = 0x8, scoped, tag = 'scoped memory for tpu_custom_call.1']
    #allocation5 [shape = 's32[2]{0}', space=sflag, size = 0x8, scoped, tag = 'scoped memory for tpu_custom_call.1']
    #allocation6 [shape = 'u8[131072]{0}', space=vmem, size = 0x20000, scoped, tag = 'input window, operand 1, single buffered']
    #allocation7 [shape = 's32[1]{0}', space=sflag, size = 0x4, scoped, tag = 'scoped memory for tpu_custom_call.1']
    #allocation8 [shape = 'u8[65536]{0}', space=vmem, size = 0x10000, scoped, tag = 'input window, operand 2, single buffered']
    #allocation9 [shape = 'u8[8192]{0}', space=vmem, size = 0x2000, scoped, tag = 'output window, operand 0']
    %11 = vsyncpa [#allocation4], 0
    %s12 = scalar_lea.sflag [#allocation4], 1
    %13 = vsyncpa %s12, 0
    %14 = vsyncpa [#allocation7], 0
    %15 = vsyncpa [#allocation5], 0
    %s16 = scalar_lea.sflag [#allocation5], 1
    %17 = vsyncpa %s16, 0
    loop: start=0, step=1, limit=4
    $region2: #{tpu_custom_call.1} parent=1 // loop_pre_header
      _
    $region3: #{tpu_custom_call.1} parent=1 // loop_header
      %s19 = sphi 0, %s23
      %p20 = scmp.ge.s32.totalorder %s19, 4
      %s26 = sphi 0, %s38
      %s27 = sphi 0, %s34
      %s28 = sphi 0, %s26
      %s29 = sphi 0, %s27
      %s30 = sphi 0, %s28
      %s31 = sphi 0, %s29
      %s43 = sphi 0, %s45
      %s46 = sphi 0, %s43
      %s47 = sphi 0, %s46
      %s63 = sphi 0, %s47
      %s67 = sphi 0, %s67
      %s69 = sphi 0, %s67
      %s70 = sphi 0, %s69
      %s84 = sphi 0, %s70
      %s88 = sphi 0, %s88
      %s90 = sphi 0, %s88
      %s91 = sphi 0, %s90
      %s105 = sphi 0, %s91
      %s109 = sphi 0, %s109
      %s111 = sphi 0, %s109
      %s112 = sphi 0, %s111
      %s126 = sphi 0, %s112
      %s130 = sphi 0, %s130
      %s132 = sphi 0, %s130
      %s133 = sphi 0, %s132
      %s147 = sphi 0, %s133
      %s151 = sphi 0, %s151
      %s153 = sphi 0, %s151
      %s154 = sphi 0, %s153
      %s168 = sphi 0, %s154
      %s174 = sphi 0, %s176
      %s177 = sphi 0, %s174
      %s178 = sphi 0, %s177
      %s194 = sphi 0, %s178
    $region4: #{tpu_custom_call.1} parent=1 // loop_header_branch
      %22 = sbr.rel (%p20) target = $region8
    $region5: #{tpu_custom_call.1} parent=1 // loop_body
      %s24 = ssub.s32 %s19, 1
      %s25 = ssub.s32 %s19, 2
      %s32 = sadd.s32 1, %s27
      %p33 = scmp.ge.s32.totalorder %s32, 1
      %s34 = scalar_select %p33, 0, %s32
      %s35 = sadd.s32 1, %s26
      %s36 = scalar_select %p33, %s35, %s26
      %p37 = scmp.ge.s32.totalorder %s36, 2
      %s38 = scalar_select %p37, 0, %s36
      %s39 = ssub.s32 %s26, %s38
      %s40 = ssub.s32 %s27, %s34
      %s41 = sor.u32 %s39, %s40
      %p42 = scmp.eq.s32.totalorder %s41, 0
      %s44 = sadd.s32 %s43, 1
      %s45 = scalar_select %p42, %s43, %s44
      %p48 = pneg %p42
      %p49 = scmp.eq.s32.totalorder %s19, 1
      %p50 = por %p48, %p49
      %p51 = scmp.ne.s32.totalorder %s43, %s46
      %p52 = scmp.eq.s32.totalorder %s19, 0
      %p53 = por %p51, %p52
      %p54 = scmp.ne.s32.totalorder %s43, %s46
      %p55 = scmp.eq.s32.totalorder %s24, 1
      %p56 = por %p54, %p55
      %p57 = scmp.ne.s32.totalorder %s46, %s47
      %p58 = scmp.eq.s32.totalorder %s24, 0
      %p59 = por %p57, %p58
      %p60 = scmp.ne.s32.totalorder %s46, %s47
      %p61 = scmp.eq.s32.totalorder %s25, 1
      %p62 = por %p60, %p61
      %p64 = scmp.ne.s32.totalorder %s47, %s63
      %p65 = scmp.eq.s32.totalorder %s25, 0
      %p66 = por %p64, %p65
      %s68 = sadd.s32 %s67, 1
      %p71 = scmp.eq.s32.totalorder %s19, 1
      %p72 = scmp.ne.s32.totalorder %s67, %s69
      %p73 = scmp.eq.s32.totalorder %s19, 0
      %p74 = por %p72, %p73
      %p75 = scmp.ne.s32.totalorder %s67, %s69
      %p76 = scmp.eq.s32.totalorder %s24, 1
      %p77 = por %p75, %p76
      %p78 = scmp.ne.s32.totalorder %s69, %s70
      %p79 = scmp.eq.s32.totalorder %s24, 0
      %p80 = por %p78, %p79
      %p81 = scmp.ne.s32.totalorder %s69, %s70
      %p82 = scmp.eq.s32.totalorder %s25, 1
      %p83 = por %p81, %p82
      %p85 = scmp.ne.s32.totalorder %s70, %s84
      %p86 = scmp.eq.s32.totalorder %s25, 0
      %p87 = por %p85, %p86
      %s89 = sadd.s32 %s88, 1
      %p92 = scmp.eq.s32.totalorder %s19, 1
      %p93 = scmp.ne.s32.totalorder %s88, %s90
      %p94 = scmp.eq.s32.totalorder %s19, 0
      %p95 = por %p93, %p94
      %p96 = scmp.ne.s32.totalorder %s88, %s90
      %p97 = scmp.eq.s32.totalorder %s24, 1
      %p98 = por %p96, %p97
      %p99 = scmp.ne.s32.totalorder %s90, %s91
      %p100 = scmp.eq.s32.totalorder %s24, 0
      %p101 = por %p99, %p100
      %p102 = scmp.ne.s32.totalorder %s90, %s91
      %p103 = scmp.eq.s32.totalorder %s25, 1
      %p104 = por %p102, %p103
      %p106 = scmp.ne.s32.totalorder %s91, %s105
      %p107 = scmp.eq.s32.totalorder %s25, 0
      %p108 = por %p106, %p107
      %s110 = sadd.s32 %s109, 1
      %p113 = scmp.eq.s32.totalorder %s19, 1
      %p114 = scmp.ne.s32.totalorder %s109, %s111
      %p115 = scmp.eq.s32.totalorder %s19, 0
      %p116 = por %p114, %p115
      %p117 = scmp.ne.s32.totalorder %s109, %s111
      %p118 = scmp.eq.s32.totalorder %s24, 1
      %p119 = por %p117, %p118
      %p120 = scmp.ne.s32.totalorder %s111, %s112
      %p121 = scmp.eq.s32.totalorder %s24, 0
      %p122 = por %p120, %p121
      %p123 = scmp.ne.s32.totalorder %s111, %s112
      %p124 = scmp.eq.s32.totalorder %s25, 1
      %p125 = por %p123, %p124
      %p127 = scmp.ne.s32.totalorder %s112, %s126
      %p128 = scmp.eq.s32.totalorder %s25, 0
      %p129 = por %p127, %p128
      %s131 = sadd.s32 %s130, 1
      %p134 = scmp.eq.s32.totalorder %s19, 1
      %p135 = scmp.ne.s32.totalorder %s130, %s132
      %p136 = scmp.eq.s32.totalorder %s19, 0
      %p137 = por %p135, %p136
      %p138 = scmp.ne.s32.totalorder %s130, %s132
      %p139 = scmp.eq.s32.totalorder %s24, 1
      %p140 = por %p138, %p139
      %p141 = scmp.ne.s32.totalorder %s132, %s133
      %p142 = scmp.eq.s32.totalorder %s24, 0
      %p143 = por %p141, %p142
      %p144 = scmp.ne.s32.totalorder %s132, %s133
      %p145 = scmp.eq.s32.totalorder %s25, 1
      %p146 = por %p144, %p145
      %p148 = scmp.ne.s32.totalorder %s133, %s147
      %p149 = scmp.eq.s32.totalorder %s25, 0
      %p150 = por %p148, %p149
      %s152 = sadd.s32 %s151, 1
      %p155 = scmp.eq.s32.totalorder %s19, 1
      %p156 = scmp.ne.s32.totalorder %s151, %s153
      %p157 = scmp.eq.s32.totalorder %s19, 0
      %p158 = por %p156, %p157
      %p159 = scmp.ne.s32.totalorder %s151, %s153
      %p160 = scmp.eq.s32.totalorder %s24, 1
      %p161 = por %p159, %p160
      %p162 = scmp.ne.s32.totalorder %s153, %s154
      %p163 = scmp.eq.s32.totalorder %s24, 0
      %p164 = por %p162, %p163
      %p165 = scmp.ne.s32.totalorder %s153, %s154
      %p166 = scmp.eq.s32.totalorder %s25, 1
      %p167 = por %p165, %p166
      %p169 = scmp.ne.s32.totalorder %s154, %s168
      %p170 = scmp.eq.s32.totalorder %s25, 0
      %p171 = por %p169, %p170
      %s172 = ssub.s32 %s26, %s38
      %p173 = scmp.eq.s32.totalorder %s172, 0
      %s175 = sadd.s32 %s174, 1
      %s176 = scalar_select %p173, %s174, %s175
      %p179 = pneg %p173
      %p180 = scmp.eq.s32.totalorder %s19, 1
      %p181 = por %p179, %p180
      %p182 = scmp.ne.s32.totalorder %s174, %s177
      %p183 = scmp.eq.s32.totalorder %s19, 0
      %p184 = por %p182, %p183
      %p185 = scmp.ne.s32.totalorder %s174, %s177
      %p186 = scmp.eq.s32.totalorder %s24, 1
      %p187 = por %p185, %p186
      %p188 = scmp.ne.s32.totalorder %s177, %s178
      %p189 = scmp.eq.s32.totalorder %s24, 0
      %p190 = por %p188, %p189
      %p191 = scmp.ne.s32.totalorder %s177, %s178
      %p192 = scmp.eq.s32.totalorder %s25, 1
      %p193 = por %p191, %p192
      %p195 = scmp.ne.s32.totalorder %s178, %s194
      %p196 = scmp.eq.s32.totalorder %s25, 0
      %p197 = por %p195, %p196
      %p198 = scmp.le.s32.totalorder 1, %s19
      %p199 = scmp.lt.s32.totalorder %s19, 3
      %p200 = pnand %p198, %p199
      %p201 = pneg %p200
      // Predicated region
      $region9: #{tpu_custom_call.1} parent=5 // pred_check
        _
      $region10: #{tpu_custom_call.1} parent=5 // pred_check_branch
        %203 = sbr.rel (%p200) target = $region12
      $region11: #{tpu_custom_call.1} parent=5 // pred_region
        %s204 = ssub.s32 %s19, 1
        // Predicated region
        $region13: #{tpu_custom_call.1} parent=11 // pred_check
          %p205 = pneg %p80
        $region14: #{tpu_custom_call.1} parent=11 // pred_check_branch
          %207 = sbr.rel (%p205) target = $region16
        $region15: #{tpu_custom_call.1} parent=11 // pred_region
          %s209 = ssub.s32 4096, 4096
          %210 = vsyncadd [#allocation7], %s209
          %s211 = sshll.u32 [#allocation6], 4
          %s212 = int_to_ptr.vmem [resolvable:$true] %s211
          %217 = dma.hbm_to_vmem [thread:$0]  %s1, 4096, %s212, [#allocation7], 256, 256, 16
        $region16: #{tpu_custom_call.1} parent=11 // pred_fallthru
          _
        // Predicated region
        $region17: #{tpu_custom_call.1} parent=11 // pred_check
          %p218 = pneg %p101
        $region18: #{tpu_custom_call.1} parent=11 // pred_check_branch
          %220 = sbr.rel (%p218) target = $region20
        $region19: #{tpu_custom_call.1} parent=11 // pred_region
          %s222 = ssub.s32 2048, 2048
          %223 = vsyncadd [#allocation7], %s222
          %s224 = sshll.u32 [#allocation8], 4
          %s225 = int_to_ptr.vmem [resolvable:$true] %s224
          %230 = dma.hbm_to_vmem [thread:$0]  %s2, 2048, %s225, [#allocation7], 128, 128, 8
        $region20: #{tpu_custom_call.1} parent=11 // pred_fallthru
          _
        // Predicated region
        $region21: #{tpu_custom_call.1} parent=11 // pred_check
          %p231 = pneg %p122
        $region22: #{tpu_custom_call.1} parent=11 // pred_check_branch
          %233 = sbr.rel (%p231) target = $region24
        $region23: #{tpu_custom_call.1} parent=11 // pred_region
          _
        $region24: #{tpu_custom_call.1} parent=11 // pred_fallthru
          _
        // Predicated region
        $region25: #{tpu_custom_call.1} parent=11 // pred_check
          %p234 = pneg %p143
        $region26: #{tpu_custom_call.1} parent=11 // pred_check_branch
          %236 = sbr.rel (%p234) target = $region28
        $region27: #{tpu_custom_call.1} parent=11 // pred_region
          _
        $region28: #{tpu_custom_call.1} parent=11 // pred_fallthru
          _
        // Predicated region
        $region29: #{tpu_custom_call.1} parent=11 // pred_check
          %p237 = pneg %p164
        $region30: #{tpu_custom_call.1} parent=11 // pred_check_branch
          %239 = sbr.rel (%p237) target = $region32
        $region31: #{tpu_custom_call.1} parent=11 // pred_region
          _
        $region32: #{tpu_custom_call.1} parent=11 // pred_fallthru
          _
      $region12: #{tpu_custom_call.1} parent=5 // pred_fallthru
        _
      %p240 = scmp.lt.s32.totalorder %s19, 2
      // Predicated region
      $region33: #{tpu_custom_call.1} parent=5 // pred_check
        %p241 = pneg %p240
      $region34: #{tpu_custom_call.1} parent=5 // pred_check_branch
        %243 = sbr.rel (%p241) target = $region36
      $region35: #{tpu_custom_call.1} parent=5 // pred_region
        // Predicated region
        $region37: #{tpu_custom_call.1} parent=35 // pred_check
          %p244 = pneg %p53
        $region38: #{tpu_custom_call.1} parent=35 // pred_check_branch
          %246 = sbr.rel (%p244) target = $region40
        $region39: #{tpu_custom_call.1} parent=35 // pred_region
          %s247 = sand.u32 %s43, 1
          %s248 = scalar_lea.sflag [#allocation4], %s247
          %s249 = sand.u32 %s43, 1
          %s250 = smul.addr %s249, 8
          %s251 = scalar_lea.vmem [#allocation3], %s250
          %s253 = ssub.s32 128, 128
          %254 = vsyncadd %s248, %s253
          %s255 = sadd.s32 %s27, %s26
          %s256 = smul.addr %s255, 128
          %s257 = scalar_lea.hbm %s0, %s256
          %s259 = sshll.u32 %s251, 4
          %s260 = int_to_ptr.vmem [resolvable:$true] %s259
          %262 = dma.hbm_to_vmem [thread:$0]  %s257, 128, %s260, %s248
        $region40: #{tpu_custom_call.1} parent=35 // pred_fallthru
          _
      $region36: #{tpu_custom_call.1} parent=5 // pred_fallthru
        _
      %p263 = scmp.le.s32.totalorder 1, %s19
      %p264 = scmp.lt.s32.totalorder %s19, 3
      %p265 = pnand %p263, %p264
      %p266 = pneg %p265
      // Predicated region
      $region41: #{tpu_custom_call.1} parent=5 // pred_check
        _
      $region42: #{tpu_custom_call.1} parent=5 // pred_check_branch
        %268 = sbr.rel (%p265) target = $region44
      $region43: #{tpu_custom_call.1} parent=5 // pred_region
        %s269 = ssub.s32 %s19, 1
        %s270 = sand.u32 %s46, 1
        %s271 = scalar_lea.sflag [#allocation4], %s270
        %s272 = sand.u32 %s46, 1
        %s273 = smul.addr %s272, 8
        %s274 = scalar_lea.vmem [#allocation3], %s273
        // Predicated region
        $region45: #{tpu_custom_call.1} parent=43 // pred_check
          %p275 = pneg %p59
        $region46: #{tpu_custom_call.1} parent=43 // pred_check_branch
          %277 = sbr.rel (%p275) target = $region48
        $region47: #{tpu_custom_call.1} parent=43 // pred_region
          %278 = dma.done %s271, 128
        $region48: #{tpu_custom_call.1} parent=43 // pred_fallthru
          _
        // Predicated region
        $region49: #{tpu_custom_call.1} parent=43 // pred_check
          %p279 = pneg %p80
        $region50: #{tpu_custom_call.1} parent=43 // pred_check_branch
          %281 = sbr.rel (%p279) target = $region52
        $region51: #{tpu_custom_call.1} parent=43 // pred_region
          %282 = dma.done [#allocation7], 4096
        $region52: #{tpu_custom_call.1} parent=43 // pred_fallthru
          _
        // Predicated region
        $region53: #{tpu_custom_call.1} parent=43 // pred_check
          %p283 = pneg %p101
        $region54: #{tpu_custom_call.1} parent=43 // pred_check_branch
          %285 = sbr.rel (%p283) target = $region56
        $region55: #{tpu_custom_call.1} parent=43 // pred_region
          %286 = dma.done [#allocation7], 2048
        $region56: #{tpu_custom_call.1} parent=43 // pred_fallthru
          _
        %s287 = sand.u32 %s46, 1
        %s288 = scalar_lea.sflag [#allocation4], %s287
        %s289 = sand.u32 %s46, 1
        %s290 = smul.addr %s289, 8
        %s291 = scalar_lea.vmem [#allocation3], %s290
        %p292 = pneg %p59
        %p293 = pneg %p56
        %p294 = pneg %p80
        %p295 = pneg %p77
        %p296 = pneg %p101
        %p297 = pneg %p98
        %p298 = pneg %p122
        %p299 = pneg %p119
        %p300 = pneg %p143
        %p301 = pneg %p140
        %p302 = pneg %p164
        %p303 = pneg %p161
        %p304 = pneg %p190
        %p305 = pneg %p187
        %s306 = sand.u32 %s177, 1
        %s307 = scalar_lea.sflag [#allocation5], %s306
        %s308 = sand.u32 %s177, 1
        %s309 = smul.addr %s308, 8
        %s310 = scalar_lea.vmem [#allocation9], %s309
        %p311 = scmp.eq.s32.totalorder %s29, 0
        // Predicated region
        $region57: #{tpu_custom_call.1} parent=43 // pred_check
          %p312 = pneg %p311
        $region58: #{tpu_custom_call.1} parent=43 // pred_check_branch
          %314 = sbr.rel (%p312) target = $region60
        $region59: #{tpu_custom_call.1} parent=43 // pred_region
          %315 = vst [vmem:[#allocation2] sm:$0xff] 0.0
          %316 = vst [vmem:[#allocation2 + $0x8] sm:$0xff] 0.0
        $region60: #{tpu_custom_call.1} parent=43 // pred_fallthru
          _
        %v317 = vld [vmem:[#allocation2] sm:$0xff]
        %v318 = vld [vmem:[#allocation2 + $0x8] sm:$0xff]
        %v319 = vld [vmem:[%s274] sm:$0xff]
        %v320 = vld [vmem:[#allocation6] sm:$0xff]
        %v321 = vld [vmem:[#allocation6 + $0x8] sm:$0xff]
        %v322 = vld [vmem:[#allocation6 + $0x10] sm:$0xff]
        %v323 = vld [vmem:[#allocation6 + $0x18] sm:$0xff]
        %v324 = vld [vmem:[#allocation6 + $0x20] sm:$0xff]
        %v325 = vld [vmem:[#allocation6 + $0x28] sm:$0xff]
        %v326 = vld [vmem:[#allocation6 + $0x30] sm:$0xff]
        %v327 = vld [vmem:[#allocation6 + $0x38] sm:$0xff]
        %v328 = vld [vmem:[#allocation6 + $0x40] sm:$0xff]
        %v329 = vld [vmem:[#allocation6 + $0x48] sm:$0xff]
        %v330 = vld [vmem:[#allocation6 + $0x50] sm:$0xff]
        %v331 = vld [vmem:[#allocation6 + $0x58] sm:$0xff]
        %v332 = vld [vmem:[#allocation6 + $0x60] sm:$0xff]
        %v333 = vld [vmem:[#allocation6 + $0x68] sm:$0xff]
        %v334 = vld [vmem:[#allocation6 + $0x70] sm:$0xff]
        %v335 = vld [vmem:[#allocation6 + $0x78] sm:$0xff]
        %v336 = vld [vmem:[#allocation6 + $0x80] sm:$0xff]
        %v337 = vld [vmem:[#allocation6 + $0x88] sm:$0xff]
        %v338 = vld [vmem:[#allocation6 + $0x90] sm:$0xff]
        %v339 = vld [vmem:[#allocation6 + $0x98] sm:$0xff]
        %v340 = vld [vmem:[#allocation6 + $0xa0] sm:$0xff]
        %v341 = vld [vmem:[#allocation6 + $0xa8] sm:$0xff]
        %v342 = vld [vmem:[#allocation6 + $0xb0] sm:$0xff]
        %v343 = vld [vmem:[#allocation6 + $0xb8] sm:$0xff]
        %v344 = vld [vmem:[#allocation6 + $0xc0] sm:$0xff]
        %v345 = vld [vmem:[#allocation6 + $0xc8] sm:$0xff]
        %v346 = vld [vmem:[#allocation6 + $0xd0] sm:$0xff]
        %v347 = vld [vmem:[#allocation6 + $0xd8] sm:$0xff]
        %v348 = vld [vmem:[#allocation6 + $0xe0] sm:$0xff]
        %v349 = vld [vmem:[#allocation6 + $0xe8] sm:$0xff]
        %v350 = vld [vmem:[#allocation6 + $0xf0] sm:$0xff]
        %v351 = vld [vmem:[#allocation6 + $0xf8] sm:$0xff]
        %352 = vmatprep.subr.mxu0 %v351
        %353 = vmatpush1.msra.mxu0 %v350
        %354 = vmatprep.subr.mxu0 %v349
        %355 = vmatpush1.msra.mxu0 %v348
        %356 = vmatprep.subr.mxu0 %v347
        %357 = vmatpush1.msra.mxu0 %v346
        %358 = vmatprep.subr.mxu0 %v345
        %359 = vmatpush1.msra.mxu0 %v344
        %360 = vmatprep.subr.mxu0 %v343
        %361 = vmatpush1.msra.mxu0 %v342
        %362 = vmatprep.subr.mxu0 %v341
        %363 = vmatpush1.msra.mxu0 %v340
        %364 = vmatprep.subr.mxu0 %v339
        %365 = vmatpush1.msra.mxu0 %v338
        %366 = vmatprep.subr.mxu0 %v337
        %367 = vmatpush1.msra.mxu0 %v336
        %368 = vmatprep.subr.mxu0 %v335
        %369 = vmatpush1.msra.mxu0 %v334
        %370 = vmatprep.subr.mxu0 %v333
        %371 = vmatpush1.msra.mxu0 %v332
        %372 = vmatprep.subr.mxu0 %v331
        %373 = vmatpush1.msra.mxu0 %v330
        %374 = vmatprep.subr.mxu0 %v329
        %375 = vmatpush1.msra.mxu0 %v328
        %376 = vmatprep.subr.mxu0 %v327
        %377 = vmatpush1.msra.mxu0 %v326
        %378 = vmatprep.subr.mxu0 %v325
        %379 = vmatpush1.msra.mxu0 %v324
        %380 = vmatprep.subr.mxu0 %v323
        %381 = vmatpush1.msra.mxu0 %v322
        %382 = vmatprep.subr.mxu0 %v321
        %383 = vmatpush1.msra.mxu0 %v320
        %384 = vmatprep.subr.mxu0 0.0
        %385 = vmatpush2.msra.mxu0 0.0
        %386 = vmatprep.subr.mxu0 0.0
        %387 = vmatpush2.msra.mxu0 0.0
        %388 = vmatprep.subr.mxu0 0.0
        %389 = vmatpush2.msra.mxu0 0.0
        %390 = vmatprep.subr.mxu0 0.0
        %391 = vmatpush2.msra.mxu0 0.0
        %392 = vmatprep.subr.mxu0 0.0
        %393 = vmatpush2.msra.mxu0 0.0
        %394 = vmatprep.subr.mxu0 0.0
        %395 = vmatpush2.msra.mxu0 0.0
        %396 = vmatprep.subr.mxu0 0.0
        %397 = vmatpush2.msra.mxu0 0.0
        %398 = vmatprep.subr.mxu0 0.0
        %399 = vmatpush2.msra.mxu0 0.0
        %400 = vmatprep.subr.mxu0 0.0
        %401 = vmatpush2.msra.mxu0 0.0
        %402 = vmatprep.subr.mxu0 0.0
        %403 = vmatpush2.msra.mxu0 0.0
        %404 = vmatprep.subr.mxu0 0.0
        %405 = vmatpush2.msra.mxu0 0.0
        %406 = vmatprep.subr.mxu0 0.0
        %407 = vmatpush2.msra.mxu0 0.0
        %408 = vmatprep.subr.mxu0 0.0
        %409 = vmatpush2.msra.mxu0 0.0
        %410 = vmatprep.subr.mxu0 0.0
        %411 = vmatpush2.msra.mxu0 0.0
        %412 = vmatprep.subr.mxu0 0.0
        %413 = vmatpush2.msra.mxu0 0.0
        %414 = vmatprep.subr.mxu0 0.0
        %415 = vmatpush2.msra.mxu0 0.0
        %416 = vmatprep.mubr.f32.mxu0 0.0
        %417 = vmatmul.mubr.f32.gmra.mxu0 %v319
        %v418 = vpop.f32.mrf.mxu0
        %v419 = vadd.f32 0.0, %v418
        %v420 = vpop.f32.mrf.mxu0
        %v421 = vadd.f32 0.0, %v420
        %422 = vdwg.mxu0
        %v423 = vadd.f32 %v317, %v419
        %v424 = vadd.f32 %v318, %v421
        %425 = vst [vmem:[#allocation2] sm:$0xff] %v423
        %426 = vst [vmem:[#allocation2 + $0x8] sm:$0xff] %v424
        // Predicated region
        $region61: #{tpu_custom_call.1} parent=43 // pred_check
          %p427 = pneg %p311
        $region62: #{tpu_custom_call.1} parent=43 // pred_check_branch
          %429 = sbr.rel (%p427) target = $region64
        $region63: #{tpu_custom_call.1} parent=43 // pred_region
          %v430 = vld [vmem:[#allocation2] sm:$0xff]
          %v431 = vld [vmem:[#allocation2 + $0x8] sm:$0xff]
          %v432 = vld [vmem:[#allocation8] sm:$0xff]
          %v433 = vld [vmem:[#allocation8 + $0x8] sm:$0xff]
          %v434 = vld [vmem:[#allocation8 + $0x10] sm:$0xff]
          %v435 = vld [vmem:[#allocation8 + $0x18] sm:$0xff]
          %v436 = vld [vmem:[#allocation8 + $0x20] sm:$0xff]
          %v437 = vld [vmem:[#allocation8 + $0x28] sm:$0xff]
          %v438 = vld [vmem:[#allocation8 + $0x30] sm:$0xff]
          %v439 = vld [vmem:[#allocation8 + $0x38] sm:$0xff]
          %v440 = vld [vmem:[#allocation8 + $0x40] sm:$0xff]
          %v441 = vld [vmem:[#allocation8 + $0x48] sm:$0xff]
          %v442 = vld [vmem:[#allocation8 + $0x50] sm:$0xff]
          %v443 = vld [vmem:[#allocation8 + $0x58] sm:$0xff]
          %v444 = vld [vmem:[#allocation8 + $0x60] sm:$0xff]
          %v445 = vld [vmem:[#allocation8 + $0x68] sm:$0xff]
          %v446 = vld [vmem:[#allocation8 + $0x70] sm:$0xff]
          %v447 = vld [vmem:[#allocation8 + $0x78] sm:$0xff]
          %448 = vmatprep.subr.mxu0 0.0
          %449 = vmatpush1.msra.mxu0 %v447
          %450 = vmatprep.subr.mxu0 0.0
          %451 = vmatpush1.msra.mxu0 %v446
          %452 = vmatprep.subr.mxu0 0.0
          %453 = vmatpush1.msra.mxu0 %v445
          %454 = vmatprep.subr.mxu0 0.0
          %455 = vmatpush1.msra.mxu0 %v444
          %456 = vmatprep.subr.mxu0 0.0
          %457 = vmatpush1.msra.mxu0 %v443
          %458 = vmatprep.subr.mxu0 0.0
          %459 = vmatpush1.msra.mxu0 %v442
          %460 = vmatprep.subr.mxu0 0.0
          %461 = vmatpush1.msra.mxu0 %v441
          %462 = vmatprep.subr.mxu0 0.0
          %463 = vmatpush1.msra.mxu0 %v440
          %464 = vmatprep.subr.mxu0 0.0
          %465 = vmatpush1.msra.mxu0 %v439
          %466 = vmatprep.subr.mxu0 0.0
          %467 = vmatpush1.msra.mxu0 %v438
          %468 = vmatprep.subr.mxu0 0.0
          %469 = vmatpush1.msra.mxu0 %v437
          %470 = vmatprep.subr.mxu0 0.0
          %471 = vmatpush1.msra.mxu0 %v436
          %472 = vmatprep.subr.mxu0 0.0
          %473 = vmatpush1.msra.mxu0 %v435
          %474 = vmatprep.subr.mxu0 0.0
          %475 = vmatpush1.msra.mxu0 %v434
          %476 = vmatprep.subr.mxu0 0.0
          %477 = vmatpush1.msra.mxu0 %v433
          %478 = vmatprep.subr.mxu0 0.0
          %479 = vmatpush1.msra.mxu0 %v432
          %480 = vmatprep.subr.mxu0 0.0
          %481 = vmatpush2.msra.mxu0 0.0
          %482 = vmatprep.subr.mxu0 0.0
          %483 = vmatpush2.msra.mxu0 0.0
          %484 = vmatprep.subr.mxu0 0.0
          %485 = vmatpush2.msra.mxu0 0.0
          %486 = vmatprep.subr.mxu0 0.0
          %487 = vmatpush2.msra.mxu0 0.0
          %488 = vmatprep.subr.mxu0 0.0
          %489 = vmatpush2.msra.mxu0 0.0
          %490 = vmatprep.subr.mxu0 0.0
          %491 = vmatpush2.msra.mxu0 0.0
          %492 = vmatprep.subr.mxu0 0.0
          %493 = vmatpush2.msra.mxu0 0.0
          %494 = vmatprep.subr.mxu0 0.0
          %495 = vmatpush2.msra.mxu0 0.0
          %496 = vmatprep.subr.mxu0 0.0
          %497 = vmatpush2.msra.mxu0 0.0
          %498 = vmatprep.subr.mxu0 0.0
          %499 = vmatpush2.msra.mxu0 0.0
          %500 = vmatprep.subr.mxu0 0.0
          %501 = vmatpush2.msra.mxu0 0.0
          %502 = vmatprep.subr.mxu0 0.0
          %503 = vmatpush2.msra.mxu0 0.0
          %504 = vmatprep.subr.mxu0 0.0
          %505 = vmatpush2.msra.mxu0 0.0
          %506 = vmatprep.subr.mxu0 0.0
          %507 = vmatpush2.msra.mxu0 0.0
          %508 = vmatprep.subr.mxu0 0.0
          %509 = vmatpush2.msra.mxu0 0.0
          %510 = vmatprep.subr.mxu0 0.0
          %511 = vmatpush2.msra.mxu0 0.0
          %512 = vmatprep.mubr.f32.mxu0 0.0
          %513 = vmatmul.mubr.f32.gmra.mxu0 %v431
          %v514 = vpop.f32.mrf.mxu0
          %v515 = vadd.f32 0.0, %v514
          %v516 = vpop.f32.mrf.mxu0
          %517 = vdwg.mxu0
          %v518 = vld [vmem:[%s3] sm:$0x1]
          %v520 = vlaneseq
          %v521 = vshrl.u32 %v520, 7
          %v522 = vsub.s32 0, %v521
          %v523 = vrot.slane %v518, %v522
          %v525 = vmul.f32 %v431, %v523
          %526 = vmatprep.subr.mxu0 0.0
          %527 = vmatpush1.msra.mxu0 %v447
          %528 = vmatprep.subr.mxu0 0.0
          %529 = vmatpush1.msra.mxu0 %v446
          %530 = vmatprep.subr.mxu0 0.0
          %531 = vmatpush1.msra.mxu0 %v445
          %532 = vmatprep.subr.mxu0 0.0
          %533 = vmatpush1.msra.mxu0 %v444
          %534 = vmatprep.subr.mxu0 0.0
          %535 = vmatpush1.msra.mxu0 %v443
          %536 = vmatprep.subr.mxu0 0.0
          %537 = vmatpush1.msra.mxu0 %v442
          %538 = vmatprep.subr.mxu0 0.0
          %539 = vmatpush1.msra.mxu0 %v441
          %540 = vmatprep.subr.mxu0 0.0
          %541 = vmatpush1.msra.mxu0 %v440
          %542 = vmatprep.subr.mxu0 0.0
          %543 = vmatpush1.msra.mxu0 %v439
          %544 = vmatprep.subr.mxu0 0.0
          %545 = vmatpush1.msra.mxu0 %v438
          %546 = vmatprep.subr.mxu0 0.0
          %547 = vmatpush1.msra.mxu0 %v437
          %548 = vmatprep.subr.mxu0 0.0
          %549 = vmatpush1.msra.mxu0 %v436
          %550 = vmatprep.subr.mxu0 0.0
          %551 = vmatpush1.msra.mxu0 %v435
          %552 = vmatprep.subr.mxu0 0.0
          %553 = vmatpush1.msra.mxu0 %v434
          %554 = vmatprep.subr.mxu0 0.0
          %555 = vmatpush1.msra.mxu0 %v433
          %556 = vmatprep.subr.mxu0 0.0
          %557 = vmatpush1.msra.mxu0 %v432
          %558 = vmatprep.subr.mxu0 0.0
          %559 = vmatpush2.msra.mxu0 0.0
          %560 = vmatprep.subr.mxu0 0.0
          %561 = vmatpush2.msra.mxu0 0.0
          %562 = vmatprep.subr.mxu0 0.0
          %563 = vmatpush2.msra.mxu0 0.0
          %564 = vmatprep.subr.mxu0 0.0
          %565 = vmatpush2.msra.mxu0 0.0
          %566 = vmatprep.subr.mxu0 0.0
          %567 = vmatpush2.msra.mxu0 0.0
          %568 = vmatprep.subr.mxu0 0.0
          %569 = vmatpush2.msra.mxu0 0.0
          %570 = vmatprep.subr.mxu0 0.0
          %571 = vmatpush2.msra.mxu0 0.0
          %572 = vmatprep.subr.mxu0 0.0
          %573 = vmatpush2.msra.mxu0 0.0
          %574 = vmatprep.subr.mxu0 0.0
          %575 = vmatpush2.msra.mxu0 0.0
          %576 = vmatprep.subr.mxu0 0.0
          %577 = vmatpush2.msra.mxu0 0.0
          %578 = vmatprep.subr.mxu0 0.0
          %579 = vmatpush2.msra.mxu0 0.0
          %580 = vmatprep.subr.mxu0 0.0
          %581 = vmatpush2.msra.mxu0 0.0
          %582 = vmatprep.subr.mxu0 0.0
          %583 = vmatpush2.msra.mxu0 0.0
          %584 = vmatprep.subr.mxu0 0.0
          %585 = vmatpush2.msra.mxu0 0.0
          %586 = vmatprep.subr.mxu0 0.0
          %587 = vmatpush2.msra.mxu0 0.0
          %588 = vmatprep.subr.mxu0 0.0
          %589 = vmatpush2.msra.mxu0 0.0
          %590 = vmatprep.mubr.f32.mxu0 0.0
          %591 = vmatmul.mubr.f32.gmra.mxu0 %v525
          %v592 = vpop.f32.mrf.mxu0
          %v593 = vadd.f32 1e-08, %v592
          %v594 = vpop.f32.mrf.mxu0
          %595 = vdwg.mxu0
          %v596 = vsub.f32 %v430, %v515
          %v597 = vrcp.pop %v593
          %v598 = vld [vmem:[%s4] sm:$0x1]
          %v599 = vmul.f32 %v596, %v597
          %v601 = vlaneseq
          %v602 = vshrl.u32 %v601, 7
          %v603 = vsub.s32 0, %v602
          %v604 = vrot.slane %v598, %v603
          %v606 = vmul.f32 %v604, %v599
          %v607 = vld [vmem:[%s5] sm:$0x1]
          %v609 = vlaneseq
          %v610 = vshrl.u32 %v609, 7
          %v611 = vsub.s32 0, %v610
          %v612 = vrot.slane %v607, %v611
          %v614 = vadd.f32 %v606, %v612
          %615 = vst [vmem:[%s310] sm:$0xff] %v614
        $region64: #{tpu_custom_call.1} parent=43 // pred_fallthru
          _
        %s616 = sand.u32 %s177, 1
        %s617 = scalar_lea.sflag [#allocation5], %s616
        %s618 = sand.u32 %s177, 1
        %s619 = smul.addr %s618, 8
        %s620 = scalar_lea.vmem [#allocation9], %s619
        // Predicated region
        $region65: #{tpu_custom_call.1} parent=43 // pred_check
          %p621 = pneg %p187
        $region66: #{tpu_custom_call.1} parent=43 // pred_check_branch
          %623 = sbr.rel (%p621) target = $region68
        $region67: #{tpu_custom_call.1} parent=43 // pred_region
          %s625 = ssub.s32 128, 128
          %626 = vsyncadd %s617, %s625
          %s627 = smul.addr %s28, 128
          %s628 = scalar_lea.hbm %s6, %s627
          %s630 = sshll.u32 %s620, 4
          %s631 = int_to_ptr.vmem [resolvable:$true] %s630
          %633 = dma.vmem_to_hbm [thread:$0]  %s631, 128, %s628, %s617
        $region68: #{tpu_custom_call.1} parent=43 // pred_fallthru
          _
      $region44: #{tpu_custom_call.1} parent=5 // pred_fallthru
        _
      %p634 = scmp.le.s32.totalorder 2, %s19
      // Predicated region
      $region69: #{tpu_custom_call.1} parent=5 // pred_check
        %p635 = pneg %p634
      $region70: #{tpu_custom_call.1} parent=5 // pred_check_branch
        %637 = sbr.rel (%p635) target = $region72
      $region71: #{tpu_custom_call.1} parent=5 // pred_region
        %s638 = ssub.s32 %s19, 2
        // Predicated region
        $region73: #{tpu_custom_call.1} parent=71 // pred_check
          %p639 = pneg %p193
        $region74: #{tpu_custom_call.1} parent=71 // pred_check_branch
          %641 = sbr.rel (%p639) target = $region76
        $region75: #{tpu_custom_call.1} parent=71 // pred_region
          %s642 = sand.u32 %s178, 1
          %s643 = scalar_lea.sflag [#allocation5], %s642
          %s644 = sand.u32 %s178, 1
          %s645 = smul.addr %s644, 8
          %s646 = scalar_lea.vmem [#allocation9], %s645
          %647 = dma.done %s643, 128
        $region76: #{tpu_custom_call.1} parent=71 // pred_fallthru
          _
      $region72: #{tpu_custom_call.1} parent=5 // pred_fallthru
        _
    $region6: #{tpu_custom_call.1} parent=1 // loop_footer
      %s23 = sadd.s32 1, %s19
    $region7: #{tpu_custom_call.1} parent=1 // loop_footer_branch
      %18 = sbr.rel target = $region3
    $region8: #{tpu_custom_call.1} parent=1 // loop_exit
      _
    %648 = vsyncpa [#allocation4], 1
    %s649 = scalar_lea.sflag [#allocation4], 1
    %650 = vsyncpa %s649, 1
    %651 = vsyncpa [#allocation7], 1
    %652 = vsyncpa [#allocation5], 1
    %s653 = scalar_lea.sflag [#allocation5], 1
    %654 = vsyncpa %s653, 1

</llo_original>
